<compile_context>
chip_gen: v7x
topology: tpu7x:2x2x1
jax: 0.10.0
libtpu: 0.0.40
codegen_flags: <defaults>
</compile_context>

<pallas_src>
import jax
import jax.numpy as jnp
from jax import lax
from jax.experimental import pallas as pl
from jax.experimental.pallas import tpu as pltpu

KT = 6        # ConvTranspose2d kernel size
STRIDE = 2    # ConvTranspose2d stride
CPAD = 128    # lane-dense output column padding (128 also right for v5e MXU)


def _round_up(v, m):
    return (v + m - 1) // m * m


def _sigmoid(x):
    return 1.0 / (1.0 + jnp.exp(-x))


# ---------------------------------------------------------------------------
# One ConvTranspose2d(k=6, stride=2, padding=0) + pointwise activation.
# NHWC in, NHWC out.  w: (Cin, Cout, 6, 6) PyTorch layout, bias: (Cout,)
# ---------------------------------------------------------------------------
def conv_transpose_act(x_nhwc, w, bias, act):
    N, H, W, Cin = x_nhwc.shape
    Cout = w.shape[1]
    Hq, Wq = H + 2, W + 2            # per-parity output grid; full out = (2Hq, 2Wq)
    Wqp = _round_up(Wq, 8)           # pad qw so the in-kernel row merge is layout-trivial
    Hp, Wpp = Hq + 2, Wqp + 2        # padded input slab seen by the kernel
    Q = Hq * Wqp
    NCOL = 4 * Cout                  # (rh, rw, co) fused into matmul columns

    # Zero-pad input: 2 rows/cols on each side (+ extra right pad for Wqp).
    xp = jnp.pad(x_nhwc, ((0, 0), (2, 2), (2, 2 + (Wqp - Wq)), (0, 0)))

    # Per-offset weight matrices.  Derivation (per spatial dim, stride 2, k=6):
    #   out[2q + r] = sum_a x_pad[q + a] * w[4 - 2a + r],  a in {0,1,2}, r in {0,1}
    # so for offset (a, b) and parity (rh, rw):
    #   out[2qh+rh, 2qw+rw, co] += x_pad[qh+a, qw+b, ci] * w[ci, co, 4-2a+rh, 4-2b+rw]
    blocks = []
    for a in range(3):
        for b in range(3):
            taps = [w[:, :, 4 - 2 * a + rh, 4 - 2 * b + rw]
                    for rh in range(2) for rw in range(2)]       # 4 x (Cin, Cout)
            blocks.append(jnp.concatenate(taps, axis=1))          # (Cin, 4*Cout)
    w_mat = jnp.stack(blocks, axis=0)                             # (9, Cin, 4*Cout)
    w_mat = jnp.pad(w_mat, ((0, 0), (0, 0), (0, CPAD - NCOL)))    # lane-pad to 128
    b_mat = jnp.pad(jnp.tile(bias, 4), (0, CPAD - NCOL)).reshape(1, CPAD)

    def kernel(x_ref, w_ref, b_ref, o_ref):
        # x_ref: (1, Hp, Wpp, Cin)  zero-padded NHWC slab for one batch element
        # w_ref: (9, Cin, CPAD)     per-offset weight matrices (cols = rh, rw, co)
        # b_ref: (1, CPAD)
        # o_ref: (1, Q, CPAD)       lane-dense output (sliced back in the wrapper)
        acc = jnp.zeros((Q, CPAD), jnp.float32)
        for a in range(3):
            for b in range(3):
                # im2col built in-kernel: static ref slice + leading-dim merge
                # (second-minor dim Wqp is a multiple of 8 -> no relayout).
                patch = x_ref[0, a:a + Hq, b:b + Wqp, :].reshape(Q, Cin)
                acc = acc + jnp.dot(patch, w_ref[3 * a + b],
                                    preferred_element_type=jnp.float32)
        o_ref[...] = act(acc + b_ref[...])[None]

    out = pl.pallas_call(
        kernel,
        out_shape=jax.ShapeDtypeStruct((N, Q, CPAD), jnp.float32),
        grid=(N,),
        in_specs=[
            pl.BlockSpec((1, Hp, Wpp, Cin), lambda n: (n, 0, 0, 0)),
            pl.BlockSpec((9, Cin, CPAD), lambda n: (0, 0, 0)),
            pl.BlockSpec((1, CPAD), lambda n: (0, 0)),
        ],
        out_specs=pl.BlockSpec((1, Q, CPAD), lambda n: (n, 0, 0)),
        compiler_params=pltpu.CompilerParams(
            dimension_semantics=("parallel",)),
    )(xp, w_mat, b_mat)

    # (N, Q, 128) -> valid columns -> interleave parities -> (N, 2Hq, 2Wq, Cout)
    out = out[:, :, :NCOL].reshape(N, Hq, Wqp, 2, 2, Cout)[:, :, :Wq]
    out = jnp.transpose(out, (0, 1, 3, 2, 4, 5)).reshape(N, 2 * Hq, 2 * Wq, Cout)
    return out


# ---------------------------------------------------------------------------
# Decoder forward: transConv1 -> tanh -> transConv2 -> sigmoid
# ---------------------------------------------------------------------------
def decoder_forward(x_nchw, params):
    w1, b1, w2, b2 = params
    x = jnp.transpose(x_nchw, (0, 2, 3, 1))                  # NCHW -> NHWC (once)
    h = conv_transpose_act(x, w1, b1, jnp.tanh)              # (N, 2H+4, 2W+4, 16)
    y = conv_transpose_act(h, w2, b2, _sigmoid)              # (N, 4H+12, 4W+12, 1)
    return jnp.transpose(y, (0, 3, 1, 2))                    # NHWC -> NCHW


# ---------------------------------------------------------------------------
# Deterministic synthetic parameters (shapes from the module's __init__).
# PyTorch ConvTranspose2d weight layout: (in_channels, out_channels, kH, kW)
# ---------------------------------------------------------------------------
def init_params(key):
    k1, k2, k3, k4 = jax.random.split(key, 4)
    w1 = 0.10 * jax.random.normal(k1, (32, 16, KT, KT), jnp.float32)
    b1 = 0.10 * jax.random.normal(k2, (16,), jnp.float32)
    w2 = 0.10 * jax.random.normal(k3, (16, 1, KT, KT), jnp.float32)
    b2 = 0.10 * jax.random.normal(k4, (1,), jnp.float32)
    return w1, b1, w2, b2


# ---------------------------------------------------------------------------
# Pure-JAX reference (ConvTranspose2d == lhs-dilated conv with flipped kernel)
# ---------------------------------------------------------------------------
def _ref_conv_transpose(x, w, b):
    wf = jnp.transpose(w, (1, 0, 2, 3))[:, :, ::-1, ::-1]    # OIHW, spatially flipped
    y = lax.conv_general_dilated(
        x, wf, window_strides=(1, 1),
        padding=((KT - 1, KT - 1), (KT - 1, KT - 1)),
        lhs_dilation=(STRIDE, STRIDE),
        dimension_numbers=("NCHW", "OIHW", "NCHW"),
        precision=lax.Precision.HIGHEST)
    return y + b.reshape(1, -1, 1, 1)


def decoder_reference(x, params):
    w1, b1, w2, b2 = params
    h = jnp.tanh(_ref_conv_transpose(x, w1, b1))
    return _sigmoid(_ref_conv_transpose(h, w2, b2))


if __name__ == "__main__":
    key = jax.random.PRNGKey(0)
    kx, kp = jax.random.split(key)
    # Decoder input = encoder latent: (N=2, C=32, 4, 4) -> output (2, 1, 28, 28)
    x = jax.random.normal(kx, (2, 32, 4, 4), jnp.float32)
    params = init_params(kp)

    out = decoder_forward(x, params)
    out = jax.block_until_ready(out)

    ref = decoder_reference(x, params)
    assert out.shape == ref.shape == (2, 1, 28, 28), out.shape
    assert jnp.allclose(out, ref, atol=2e-4, rtol=2e-4), \
        float(jnp.max(jnp.abs(out - ref)))

    print("KERNEL_OK")
</pallas_src>

<mosaic_0001>
module attributes {stable_mosaic.version = 11 : i64} {
  func.func @kernel(%arg0: i32, %arg1: memref<1x8x10x32xf32, #tpu.memory_space<vmem>>, %arg2: memref<9x32x128xf32, #tpu.memory_space<vmem>>, %arg3: memref<1x128xf32, #tpu.memory_space<vmem>>, %arg4: memref<1x48x128xf32, #tpu.memory_space<vmem>>) attributes {dimension_semantics = [#tpu.dimension_semantics<parallel>], iteration_bounds = array<i64: 2>, scalar_prefetch = 0 : i64, scratch_operands = 0 : i64, tpu.core_type = #tpu.core_type<tc>, window_params = [{transform_indices = @transform_0, window_bounds = array<i64: 1, 8, 10, 32>}, {pipeline_mode = #tpu.pipeline_mode<synchronous>, transform_indices = @transform_1, window_bounds = array<i64: 9, 32, 128>}, {pipeline_mode = #tpu.pipeline_mode<synchronous>, transform_indices = @transform_2, window_bounds = array<i64: 1, 128>}, {transform_indices = @transform_3, window_bounds = array<i64: 1, 48, 128>}]} {
    %cst = arith.constant 0.000000e+00 : f32
    %0 = vector.broadcast %cst : f32 to vector<48x128xf32>
    %c0 = arith.constant 0 : index
    %c0_0 = arith.constant 0 : index
    %c0_1 = arith.constant 0 : index
    %c0_2 = arith.constant 0 : index
    %1 = vector.load %arg1[%c0, %c0_0, %c0_1, %c0_2] : memref<1x8x10x32xf32, #tpu.memory_space<vmem>>, vector<1x6x8x32xf32>
    %2 = vector.shape_cast %1 : vector<1x6x8x32xf32> to vector<6x8x32xf32>
    %3 = vector.shape_cast %2 : vector<6x8x32xf32> to vector<48x32xf32>
    %c0_3 = arith.constant 0 : index
    %c0_4 = arith.constant 0 : index
    %c0_5 = arith.constant 0 : index
    %4 = vector.load %arg2[%c0_3, %c0_4, %c0_5] : memref<9x32x128xf32, #tpu.memory_space<vmem>>, vector<1x32x128xf32>
    %5 = vector.shape_cast %4 : vector<1x32x128xf32> to vector<32x128xf32>
    %cst_6 = arith.constant dense<0.000000e+00> : vector<48x128xf32>
    %6 = tpu.matmul %3, %5, %cst_6 {dimension_numbers = #tpu.dot_dimension_numbers<[1], [0], [0], [1], [0, 0, 1, 1], [], []>} : vector<48x32xf32>, vector<32x128xf32>, vector<48x128xf32> -> vector<48x128xf32>
    %7 = arith.addf %0, %6 : vector<48x128xf32>
    %c0_7 = arith.constant 0 : index
    %c0_8 = arith.constant 0 : index
    %c1 = arith.constant 1 : index
    %c0_9 = arith.constant 0 : index
    %8 = vector.load %arg1[%c0_7, %c0_8, %c1, %c0_9] : memref<1x8x10x32xf32, #tpu.memory_space<vmem>>, vector<1x6x8x32xf32>
    %9 = vector.shape_cast %8 : vector<1x6x8x32xf32> to vector<6x8x32xf32>
    %10 = vector.shape_cast %9 : vector<6x8x32xf32> to vector<48x32xf32>
    %c1_10 = arith.constant 1 : index
    %c0_11 = arith.constant 0 : index
    %c0_12 = arith.constant 0 : index
    %11 = vector.load %arg2[%c1_10, %c0_11, %c0_12] : memref<9x32x128xf32, #tpu.memory_space<vmem>>, vector<1x32x128xf32>
    %12 = vector.shape_cast %11 : vector<1x32x128xf32> to vector<32x128xf32>
    %cst_13 = arith.constant dense<0.000000e+00> : vector<48x128xf32>
    %13 = tpu.matmul %10, %12, %cst_13 {dimension_numbers = #tpu.dot_dimension_numbers<[1], [0], [0], [1], [0, 0, 1, 1], [], []>} : vector<48x32xf32>, vector<32x128xf32>, vector<48x128xf32> -> vector<48x128xf32>
    %14 = arith.addf %7, %13 : vector<48x128xf32>
    %c0_14 = arith.constant 0 : index
    %c0_15 = arith.constant 0 : index
    %c2 = arith.constant 2 : index
    %c0_16 = arith.constant 0 : index
    %15 = vector.load %arg1[%c0_14, %c0_15, %c2, %c0_16] : memref<1x8x10x32xf32, #tpu.memory_space<vmem>>, vector<1x6x8x32xf32>
    %16 = vector.shape_cast %15 : vector<1x6x8x32xf32> to vector<6x8x32xf32>
    %17 = vector.shape_cast %16 : vector<6x8x32xf32> to vector<48x32xf32>
    %c2_17 = arith.constant 2 : index
    %c0_18 = arith.constant 0 : index
    %c0_19 = arith.constant 0 : index
    %18 = vector.load %arg2[%c2_17, %c0_18, %c0_19] : memref<9x32x128xf32, #tpu.memory_space<vmem>>, vector<1x32x128xf32>
    %19 = vector.shape_cast %18 : vector<1x32x128xf32> to vector<32x128xf32>
    %cst_20 = arith.constant dense<0.000000e+00> : vector<48x128xf32>
    %20 = tpu.matmul %17, %19, %cst_20 {dimension_numbers = #tpu.dot_dimension_numbers<[1], [0], [0], [1], [0, 0, 1, 1], [], []>} : vector<48x32xf32>, vector<32x128xf32>, vector<48x128xf32> -> vector<48x128xf32>
    %21 = arith.addf %14, %20 : vector<48x128xf32>
    %c0_21 = arith.constant 0 : index
    %c1_22 = arith.constant 1 : index
    %c0_23 = arith.constant 0 : index
    %c0_24 = arith.constant 0 : index
    %22 = vector.load %arg1[%c0_21, %c1_22, %c0_23, %c0_24] : memref<1x8x10x32xf32, #tpu.memory_space<vmem>>, vector<1x6x8x32xf32>
    %23 = vector.shape_cast %22 : vector<1x6x8x32xf32> to vector<6x8x32xf32>
    %24 = vector.shape_cast %23 : vector<6x8x32xf32> to vector<48x32xf32>
    %c3 = arith.constant 3 : index
    %c0_25 = arith.constant 0 : index
    %c0_26 = arith.constant 0 : index
    %25 = vector.load %arg2[%c3, %c0_25, %c0_26] : memref<9x32x128xf32, #tpu.memory_space<vmem>>, vector<1x32x128xf32>
    %26 = vector.shape_cast %25 : vector<1x32x128xf32> to vector<32x128xf32>
    %cst_27 = arith.constant dense<0.000000e+00> : vector<48x128xf32>
    %27 = tpu.matmul %24, %26, %cst_27 {dimension_numbers = #tpu.dot_dimension_numbers<[1], [0], [0], [1], [0, 0, 1, 1], [], []>} : vector<48x32xf32>, vector<32x128xf32>, vector<48x128xf32> -> vector<48x128xf32>
    %28 = arith.addf %21, %27 : vector<48x128xf32>
    %c0_28 = arith.constant 0 : index
    %c1_29 = arith.constant 1 : index
    %c1_30 = arith.constant 1 : index
    %c0_31 = arith.constant 0 : index
    %29 = vector.load %arg1[%c0_28, %c1_29, %c1_30, %c0_31] : memref<1x8x10x32xf32, #tpu.memory_space<vmem>>, vector<1x6x8x32xf32>
    %30 = vector.shape_cast %29 : vector<1x6x8x32xf32> to vector<6x8x32xf32>
    %31 = vector.shape_cast %30 : vector<6x8x32xf32> to vector<48x32xf32>
    %c4 = arith.constant 4 : index
    %c0_32 = arith.constant 0 : index
    %c0_33 = arith.constant 0 : index
    %32 = vector.load %arg2[%c4, %c0_32, %c0_33] : memref<9x32x128xf32, #tpu.memory_space<vmem>>, vector<1x32x128xf32>
    %33 = vector.shape_cast %32 : vector<1x32x128xf32> to vector<32x128xf32>
    %cst_34 = arith.constant dense<0.000000e+00> : vector<48x128xf32>
    %34 = tpu.matmul %31, %33, %cst_34 {dimension_numbers = #tpu.dot_dimension_numbers<[1], [0], [0], [1], [0, 0, 1, 1], [], []>} : vector<48x32xf32>, vector<32x128xf32>, vector<48x128xf32> -> vector<48x128xf32>
    %35 = arith.addf %28, %34 : vector<48x128xf32>
    %c0_35 = arith.constant 0 : index
    %c1_36 = arith.constant 1 : index
    %c2_37 = arith.constant 2 : index
    %c0_38 = arith.constant 0 : index
    %36 = vector.load %arg1[%c0_35, %c1_36, %c2_37, %c0_38] : memref<1x8x10x32xf32, #tpu.memory_space<vmem>>, vector<1x6x8x32xf32>
    %37 = vector.shape_cast %36 : vector<1x6x8x32xf32> to vector<6x8x32xf32>
    %38 = vector.shape_cast %37 : vector<6x8x32xf32> to vector<48x32xf32>
    %c5 = arith.constant 5 : index
    %c0_39 = arith.constant 0 : index
    %c0_40 = arith.constant 0 : index
    %39 = vector.load %arg2[%c5, %c0_39, %c0_40] : memref<9x32x128xf32, #tpu.memory_space<vmem>>, vector<1x32x128xf32>
    %40 = vector.shape_cast %39 : vector<1x32x128xf32> to vector<32x128xf32>
    %cst_41 = arith.constant dense<0.000000e+00> : vector<48x128xf32>
    %41 = tpu.matmul %38, %40, %cst_41 {dimension_numbers = #tpu.dot_dimension_numbers<[1], [0], [0], [1], [0, 0, 1, 1], [], []>} : vector<48x32xf32>, vector<32x128xf32>, vector<48x128xf32> -> vector<48x128xf32>
    %42 = arith.addf %35, %41 : vector<48x128xf32>
    %c0_42 = arith.constant 0 : index
    %c2_43 = arith.constant 2 : index
    %c0_44 = arith.constant 0 : index
    %c0_45 = arith.constant 0 : index
    %43 = vector.load %arg1[%c0_42, %c2_43, %c0_44, %c0_45] : memref<1x8x10x32xf32, #tpu.memory_space<vmem>>, vector<1x6x8x32xf32>
    %44 = vector.shape_cast %43 : vector<1x6x8x32xf32> to vector<6x8x32xf32>
    %45 = vector.shape_cast %44 : vector<6x8x32xf32> to vector<48x32xf32>
    %c6 = arith.constant 6 : index
    %c0_46 = arith.constant 0 : index
    %c0_47 = arith.constant 0 : index
    %46 = vector.load %arg2[%c6, %c0_46, %c0_47] : memref<9x32x128xf32, #tpu.memory_space<vmem>>, vector<1x32x128xf32>
    %47 = vector.shape_cast %46 : vector<1x32x128xf32> to vector<32x128xf32>
    %cst_48 = arith.constant dense<0.000000e+00> : vector<48x128xf32>
    %48 = tpu.matmul %45, %47, %cst_48 {dimension_numbers = #tpu.dot_dimension_numbers<[1], [0], [0], [1], [0, 0, 1, 1], [], []>} : vector<48x32xf32>, vector<32x128xf32>, vector<48x128xf32> -> vector<48x128xf32>
    %49 = arith.addf %42, %48 : vector<48x128xf32>
    %c0_49 = arith.constant 0 : index
    %c2_50 = arith.constant 2 : index
    %c1_51 = arith.constant 1 : index
    %c0_52 = arith.constant 0 : index
    %50 = vector.load %arg1[%c0_49, %c2_50, %c1_51, %c0_52] : memref<1x8x10x32xf32, #tpu.memory_space<vmem>>, vector<1x6x8x32xf32>
    %51 = vector.shape_cast %50 : vector<1x6x8x32xf32> to vector<6x8x32xf32>
    %52 = vector.shape_cast %51 : vector<6x8x32xf32> to vector<48x32xf32>
    %c7 = arith.constant 7 : index
    %c0_53 = arith.constant 0 : index
    %c0_54 = arith.constant 0 : index
    %53 = vector.load %arg2[%c7, %c0_53, %c0_54] : memref<9x32x128xf32, #tpu.memory_space<vmem>>, vector<1x32x128xf32>
    %54 = vector.shape_cast %53 : vector<1x32x128xf32> to vector<32x128xf32>
    %cst_55 = arith.constant dense<0.000000e+00> : vector<48x128xf32>
    %55 = tpu.matmul %52, %54, %cst_55 {dimension_numbers = #tpu.dot_dimension_numbers<[1], [0], [0], [1], [0, 0, 1, 1], [], []>} : vector<48x32xf32>, vector<32x128xf32>, vector<48x128xf32> -> vector<48x128xf32>
    %56 = arith.addf %49, %55 : vector<48x128xf32>
    %c0_56 = arith.constant 0 : index
    %c2_57 = arith.constant 2 : index
    %c2_58 = arith.constant 2 : index
    %c0_59 = arith.constant 0 : index
    %57 = vector.load %arg1[%c0_56, %c2_57, %c2_58, %c0_59] : memref<1x8x10x32xf32, #tpu.memory_space<vmem>>, vector<1x6x8x32xf32>
    %58 = vector.shape_cast %57 : vector<1x6x8x32xf32> to vector<6x8x32xf32>
    %59 = vector.shape_cast %58 : vector<6x8x32xf32> to vector<48x32xf32>
    %c8 = arith.constant 8 : index
    %c0_60 = arith.constant 0 : index
    %c0_61 = arith.constant 0 : index
    %60 = vector.load %arg2[%c8, %c0_60, %c0_61] : memref<9x32x128xf32, #tpu.memory_space<vmem>>, vector<1x32x128xf32>
    %61 = vector.shape_cast %60 : vector<1x32x128xf32> to vector<32x128xf32>
    %cst_62 = arith.constant dense<0.000000e+00> : vector<48x128xf32>
    %62 = tpu.matmul %59, %61, %cst_62 {dimension_numbers = #tpu.dot_dimension_numbers<[1], [0], [0], [1], [0, 0, 1, 1], [], []>} : vector<48x32xf32>, vector<32x128xf32>, vector<48x128xf32> -> vector<48x128xf32>
    %63 = arith.addf %56, %62 : vector<48x128xf32>
    %c0_63 = arith.constant 0 : index
    %c0_64 = arith.constant 0 : index
    %64 = vector.load %arg3[%c0_63, %c0_64] : memref<1x128xf32, #tpu.memory_space<vmem>>, vector<1x128xf32>
    %65 = vector.broadcast %64 : vector<1x128xf32> to vector<48x128xf32>
    %66 = arith.addf %63, %65 : vector<48x128xf32>
    %67 = math.tanh %66 : vector<48x128xf32>
    %68 = vector.shape_cast %67 : vector<48x128xf32> to vector<1x48x128xf32>
    %c0_65 = arith.constant 0 : index
    %c0_66 = arith.constant 0 : index
    %c0_67 = arith.constant 0 : index
    %69 = vector.load %arg4[%c0_65, %c0_66, %c0_67] : memref<1x48x128xf32, #tpu.memory_space<vmem>>, vector<1x48x128xf32>
    tpu.vector_store %arg4[%c0_65, %c0_66, %c0_67], %68 {strides = array<i32>} : memref<1x48x128xf32, #tpu.memory_space<vmem>>, vector<1x48x128xf32>,
    return
  }
  func.func @transform_0(%arg0: i32) -> (i32, i32, i32, i32) {
    %c0_i32 = arith.constant 0 : i32
    %c0_i32_0 = arith.constant 0 : i32
    %c0_i32_1 = arith.constant 0 : i32
    %c0_i32_2 = arith.constant 0 : i32
    return %arg0, %c0_i32, %c0_i32_0, %c0_i32_1 : i32, i32, i32, i32
  }
  func.func @transform_1(%arg0: i32) -> (i32, i32, i32) {
    %c0_i32 = arith.constant 0 : i32
    %c0_i32_0 = arith.constant 0 : i32
    %c0_i32_1 = arith.constant 0 : i32
    %c0_i32_2 = arith.constant 0 : i32
    return %c0_i32, %c0_i32_0, %c0_i32_1 : i32, i32, i32
  }
  func.func @transform_2(%arg0: i32) -> (i32, i32) {
    %c0_i32 = arith.constant 0 : i32
    %c0_i32_0 = arith.constant 0 : i32
    %c0_i32_1 = arith.constant 0 : i32
    return %c0_i32, %c0_i32_0 : i32, i32
  }
  func.func @transform_3(%arg0: i32) -> (i32, i32, i32) {
    %c0_i32 = arith.constant 0 : i32
    %c0_i32_0 = arith.constant 0 : i32
    %c0_i32_1 = arith.constant 0 : i32
    return %arg0, %c0_i32, %c0_i32_0 : i32, i32, i32
  }
}

</mosaic_0001>

<llo_original>
// kernel: tpu_custom_call.1
$region0: #{tpu_custom_call.1}
  #allocation0 [shape = 'u32[]', space=smem, size = 0x4, offset = 0x4, fixed_abs, tag = 'smem constant byte address 0x4 - core index']
  #allocation1 [shape = 'u32[144,128]{1,0:T(1,128)}', space=vmem, size = 0x12000, scoped, tag = 'internal scratch']
  %s0 = inlined_call_operand.vmem [shape: f32[2,8,10,32], index: 0, kind: input, shape index: {}]
  %s1 = inlined_call_operand.vmem [shape: f32[9,32,128], index: 1, kind: input, shape index: {}]
  %s2 = inlined_call_operand.vmem [shape: f32[1,128], index: 2, kind: input, shape index: {}]
  %s3 = inlined_call_operand.hbm [shape: f32[2,48,128], index: 3, kind: output, shape index: {}]
  %s4 = sld [smem:[#allocation0]]
  $region45: #{tpu_custom_call.1} parent=0
    _
  %s6 = ssub.s32 1, %s4
  %s7 = scalar_select 0, %s6, %s4
  $region1: #{tpu_custom_call.1} parent=0
    #allocation2 [shape = 'u8[49152]{0}', space=vmem, size = 0xc000, scoped, tag = 'output window, operand 0']
    #allocation3 [shape = 's32[2]{0}', space=sflag, size = 0x8, scoped, tag = 'scoped memory for tpu_custom_call.1']
    %8 = vsyncpa [#allocation3], 0
    %s9 = scalar_lea.sflag [#allocation3], 1
    %10 = vsyncpa %s9, 0
    loop: start=0, step=1, limit=4
    $region2: #{tpu_custom_call.1} parent=1 // loop_pre_header
      _
    $region3: #{tpu_custom_call.1} parent=1 // loop_header
      %s12 = sphi 0, %s16
      %p13 = scmp.ge.s32.totalorder %s12, 4
      %s22 = sphi 0, %s24
      %s25 = sphi 0, %s22
      %s26 = sphi 0, %s25
      %s42 = sphi 0, %s26
      %s46 = sphi 0, %s46
      %s48 = sphi 0, %s46
      %s49 = sphi 0, %s48
      %s63 = sphi 0, %s49
      %s67 = sphi 0, %s67
      %s69 = sphi 0, %s67
      %s70 = sphi 0, %s69
      %s84 = sphi 0, %s70
      %s90 = sphi 0, %s92
      %s93 = sphi 0, %s90
      %s94 = sphi 0, %s93
      %s110 = sphi 0, %s94
    $region4: #{tpu_custom_call.1} parent=1 // loop_header_branch
      %15 = sbr.rel (%p13) target = $region8
    $region5: #{tpu_custom_call.1} parent=1 // loop_body
      %s17 = ssub.s32 %s12, 1
      %s18 = ssub.s32 %s12, 2
      %s19 = sadd.s32 %s12, 1
      %s20 = ssub.s32 %s12, %s19
      %p21 = scmp.eq.s32.totalorder %s20, 0
      %s23 = sadd.s32 %s22, 1
      %s24 = scalar_select %p21, %s22, %s23
      %p27 = pneg %p21
      %p28 = scmp.eq.s32.totalorder %s12, 1
      %p29 = por %p27, %p28
      %p30 = scmp.ne.s32.totalorder %s22, %s25
      %p31 = scmp.eq.s32.totalorder %s12, 0
      %p32 = por %p30, %p31
      %p33 = scmp.ne.s32.totalorder %s22, %s25
      %p34 = scmp.eq.s32.totalorder %s17, 1
      %p35 = por %p33, %p34
      %p36 = scmp.ne.s32.totalorder %s25, %s26
      %p37 = scmp.eq.s32.totalorder %s17, 0
      %p38 = por %p36, %p37
      %p39 = scmp.ne.s32.totalorder %s25, %s26
      %p40 = scmp.eq.s32.totalorder %s18, 1
      %p41 = por %p39, %p40
      %p43 = scmp.ne.s32.totalorder %s26, %s42
      %p44 = scmp.eq.s32.totalorder %s18, 0
      %p45 = por %p43, %p44
      %s47 = sadd.s32 %s46, 1
      %p50 = scmp.eq.s32.totalorder %s12, 1
      %p51 = scmp.ne.s32.totalorder %s46, %s48
      %p52 = scmp.eq.s32.totalorder %s12, 0
      %p53 = por %p51, %p52
      %p54 = scmp.ne.s32.totalorder %s46, %s48
      %p55 = scmp.eq.s32.totalorder %s17, 1
      %p56 = por %p54, %p55
      %p57 = scmp.ne.s32.totalorder %s48, %s49
      %p58 = scmp.eq.s32.totalorder %s17, 0
      %p59 = por %p57, %p58
      %p60 = scmp.ne.s32.totalorder %s48, %s49
      %p61 = scmp.eq.s32.totalorder %s18, 1
      %p62 = por %p60, %p61
      %p64 = scmp.ne.s32.totalorder %s49, %s63
      %p65 = scmp.eq.s32.totalorder %s18, 0
      %p66 = por %p64, %p65
      %s68 = sadd.s32 %s67, 1
      %p71 = scmp.eq.s32.totalorder %s12, 1
      %p72 = scmp.ne.s32.totalorder %s67, %s69
      %p73 = scmp.eq.s32.totalorder %s12, 0
      %p74 = por %p72, %p73
      %p75 = scmp.ne.s32.totalorder %s67, %s69
      %p76 = scmp.eq.s32.totalorder %s17, 1
      %p77 = por %p75, %p76
      %p78 = scmp.ne.s32.totalorder %s69, %s70
      %p79 = scmp.eq.s32.totalorder %s17, 0
      %p80 = por %p78, %p79
      %p81 = scmp.ne.s32.totalorder %s69, %s70
      %p82 = scmp.eq.s32.totalorder %s18, 1
      %p83 = por %p81, %p82
      %p85 = scmp.ne.s32.totalorder %s70, %s84
      %p86 = scmp.eq.s32.totalorder %s18, 0
      %p87 = por %p85, %p86
      %s88 = ssub.s32 %s12, %s19
      %p89 = scmp.eq.s32.totalorder %s88, 0
      %s91 = sadd.s32 %s90, 1
      %s92 = scalar_select %p89, %s90, %s91
      %p95 = pneg %p89
      %p96 = scmp.eq.s32.totalorder %s12, 1
      %p97 = por %p95, %p96
      %p98 = scmp.ne.s32.totalorder %s90, %s93
      %p99 = scmp.eq.s32.totalorder %s12, 0
      %p100 = por %p98, %p99
      %p101 = scmp.ne.s32.totalorder %s90, %s93
      %p102 = scmp.eq.s32.totalorder %s17, 1
      %p103 = por %p101, %p102
      %p104 = scmp.ne.s32.totalorder %s93, %s94
      %p105 = scmp.eq.s32.totalorder %s17, 0
      %p106 = por %p104, %p105
      %p107 = scmp.ne.s32.totalorder %s93, %s94
      %p108 = scmp.eq.s32.totalorder %s18, 1
      %p109 = por %p107, %p108
      %p111 = scmp.ne.s32.totalorder %s94, %s110
      %p112 = scmp.eq.s32.totalorder %s18, 0
      %p113 = por %p111, %p112
      %p114 = scmp.le.s32.totalorder 1, %s12
      %p115 = scmp.lt.s32.totalorder %s12, 3
      %p116 = pnand %p114, %p115
      %p117 = pneg %p116
      // Predicated region
      $region9: #{tpu_custom_call.1} parent=5 // pred_check
        _
      $region10: #{tpu_custom_call.1} parent=5 // pred_check_branch
        %119 = sbr.rel (%p116) target = $region12
      $region11: #{tpu_custom_call.1} parent=5 // pred_region
        %s120 = ssub.s32 %s12, 1
        // Predicated region
        $region13: #{tpu_custom_call.1} parent=11 // pred_check
          %p121 = pneg %p59
        $region14: #{tpu_custom_call.1} parent=11 // pred_check_branch
          %123 = sbr.rel (%p121) target = $region16
        $region15: #{tpu_custom_call.1} parent=11 // pred_region
          _
        $region16: #{tpu_custom_call.1} parent=11 // pred_fallthru
          _
        // Predicated region
        $region17: #{tpu_custom_call.1} parent=11 // pred_check
          %p124 = pneg %p80
        $region18: #{tpu_custom_call.1} parent=11 // pred_check_branch
          %126 = sbr.rel (%p124) target = $region20
        $region19: #{tpu_custom_call.1} parent=11 // pred_region
          _
        $region20: #{tpu_custom_call.1} parent=11 // pred_fallthru
          _
      $region12: #{tpu_custom_call.1} parent=5 // pred_fallthru
        _
      %p127 = scmp.lt.s32.totalorder %s12, 2
      // Predicated region
      $region21: #{tpu_custom_call.1} parent=5 // pred_check
        %p128 = pneg %p127
      $region22: #{tpu_custom_call.1} parent=5 // pred_check_branch
        %130 = sbr.rel (%p128) target = $region24
      $region23: #{tpu_custom_call.1} parent=5 // pred_region
        // Predicated region
        $region25: #{tpu_custom_call.1} parent=23 // pred_check
          %p131 = pneg %p32
        $region26: #{tpu_custom_call.1} parent=23 // pred_check_branch
          %133 = sbr.rel (%p131) target = $region28
        $region27: #{tpu_custom_call.1} parent=23 // pred_region
          %p134 = scmp.lt.s32.totalorder %s12, 1
          %s135 = scalar_select %p134, %s12, 1
          %s136 = smul.addr %s135, 16
          %s137 = smul.addr %s136, 8
          %s138 = scalar_lea.vmem %s0, %s137
        $region28: #{tpu_custom_call.1} parent=23 // pred_fallthru
          _
      $region24: #{tpu_custom_call.1} parent=5 // pred_fallthru
        _
      %p139 = scmp.le.s32.totalorder 1, %s12
      %p140 = scmp.lt.s32.totalorder %s12, 3
      %p141 = pnand %p139, %p140
      %p142 = pneg %p141
      // Predicated region
      $region29: #{tpu_custom_call.1} parent=5 // pred_check
        _
      $region30: #{tpu_custom_call.1} parent=5 // pred_check_branch
        %144 = sbr.rel (%p141) target = $region32
      $region31: #{tpu_custom_call.1} parent=5 // pred_region
        %s145 = ssub.s32 %s12, 1
        %p146 = scmp.lt.s32.totalorder %s17, 1
        %s147 = scalar_select %p146, %s17, 1
        %s148 = smul.addr %s147, 16
        %s149 = smul.addr %s148, 8
        %s150 = scalar_lea.vmem %s0, %s149
        %p151 = pneg %p38
        %p152 = pneg %p35
        %p153 = pneg %p59
        %p154 = pneg %p56
        %p155 = pneg %p80
        %p156 = pneg %p77
        %p157 = pneg %p106
        %p158 = pneg %p103
        %s159 = sand.u32 %s93, 1
        %s160 = scalar_lea.sflag [#allocation3], %s159
        %s161 = sand.u32 %s93, 1
        %s162 = smul.addr %s161, 48
        %s163 = scalar_lea.vmem [#allocation2], %s162
        %p164 = scmp.lt.s32.totalorder %s17, 1
        %s165 = scalar_select %p164, %s17, 1
        %s166 = smul.addr %s165, 16
        %s167 = smul.addr %s166, 8
        %s168 = scalar_lea.vmem %s0, %s167
        %v169 = vld [vmem:[%s168] sm:$0xff]
        %v170 = vld [vmem:[%s168 + $0x10] sm:$0xff]
        %v171 = vld [vmem:[%s168 + $0x20] sm:$0xff]
        %v172 = vld [vmem:[%s168 + $0x30] sm:$0xff]
        %v173 = vld [vmem:[%s168 + $0x40] sm:$0xff]
        %v174 = vld [vmem:[%s168 + $0x50] sm:$0xff]
        %v175 = vld [vmem:[%s1] sm:$0xff]
        %v176 = vld [vmem:[%s1 + $0x8] sm:$0xff]
        %v177 = vld [vmem:[%s1 + $0x10] sm:$0xff]
        %v178 = vld [vmem:[%s1 + $0x18] sm:$0xff]
        %v179 = vld [vmem:[%s168 + $0x1] sm:$0xff]
        %v180 = vld [vmem:[%s168 + $0x11] sm:$0xff]
        %v181 = vld [vmem:[%s168 + $0x21] sm:$0xff]
        %v182 = vld [vmem:[%s168 + $0x31] sm:$0xff]
        %v183 = vld [vmem:[%s168 + $0x41] sm:$0xff]
        %v184 = vld [vmem:[%s168 + $0x51] sm:$0xff]
        %s185 = scalar_lea.vmem %s1, 32
        %v186 = vld [vmem:[%s185] sm:$0xff]
        %v187 = vld [vmem:[%s185 + $0x8] sm:$0xff]
        %v188 = vld [vmem:[%s185 + $0x10] sm:$0xff]
        %v189 = vld [vmem:[%s185 + $0x18] sm:$0xff]
        %vm190 = vcmask 261120
        %v192 = vsel %vm190, %v179, 0
        %v195 = vsel %vm190, %v180, 0
        %v198 = vsel %vm190, %v181, 0
        %v201 = vsel %vm190, %v182, 0
        %v204 = vsel %vm190, %v183, 0
        %v207 = vsel %vm190, %v184, 0
        %209 = vmatprep.subr.mxu0 0.0
        %210 = vmatpush1.msra.mxu0 %v186
        %211 = vmatprep.subr.mxu0 0.0
        %212 = vmatpush1.msra.mxu0 %v187
        %213 = vmatprep.subr.mxu0 0.0
        %214 = vmatpush1.msra.mxu0 %v188
        %215 = vmatprep.subr.mxu0 0.0
        %216 = vmatpush1.msra.mxu0 %v189
        %217 = vmatprep.subr.mxu0 0.0
        %218 = vmatpush1.msra.mxu0 0.0
        %219 = vmatprep.subr.mxu0 0.0
        %220 = vmatpush1.msra.mxu0 0.0
        %221 = vmatprep.subr.mxu0 0.0
        %222 = vmatpush1.msra.mxu0 0.0
        %223 = vmatprep.subr.mxu0 0.0
        %224 = vmatpush1.msra.mxu0 0.0
        %225 = vmatprep.subr.mxu0 0.0
        %226 = vmatpush1.msra.mxu0 0.0
        %227 = vmatprep.subr.mxu0 0.0
        %228 = vmatpush1.msra.mxu0 0.0
        %229 = vmatprep.subr.mxu0 0.0
        %230 = vmatpush1.msra.mxu0 0.0
        %231 = vmatprep.subr.mxu0 0.0
        %232 = vmatpush1.msra.mxu0 0.0
        %233 = vmatprep.subr.mxu0 0.0
        %234 = vmatpush1.msra.mxu0 0.0
        %235 = vmatprep.subr.mxu0 0.0
        %236 = vmatpush1.msra.mxu0 0.0
        %237 = vmatprep.subr.mxu0 0.0
        %238 = vmatpush1.msra.mxu0 0.0
        %239 = vmatprep.subr.mxu0 0.0
        %240 = vmatpush1.msra.mxu0 0.0
        %241 = vmatprep.subr.mxu0 0.0
        %242 = vmatpush1.msra.mxu0 0.0
        %243 = vmatprep.subr.mxu0 0.0
        %244 = vmatpush1.msra.mxu0 0.0
        %245 = vmatprep.subr.mxu0 0.0
        %246 = vmatpush1.msra.mxu0 0.0
        %247 = vmatprep.subr.mxu0 0.0
        %248 = vmatpush1.msra.mxu0 0.0
        %249 = vmatprep.subr.mxu0 0.0
        %250 = vmatpush1.msra.mxu0 0.0
        %251 = vmatprep.subr.mxu0 0.0
        %252 = vmatpush1.msra.mxu0 0.0
        %253 = vmatprep.subr.mxu0 0.0
        %254 = vmatpush1.msra.mxu0 0.0
        %255 = vmatprep.subr.mxu0 0.0
        %256 = vmatpush1.msra.mxu0 0.0
        %257 = vmatprep.subr.mxu0 0.0
        %258 = vmatpush1.msra.mxu0 0.0
        %259 = vmatprep.subr.mxu0 0.0
        %260 = vmatpush1.msra.mxu0 0.0
        %261 = vmatprep.subr.mxu0 0.0
        %262 = vmatpush1.msra.mxu0 0.0
        %263 = vmatprep.subr.mxu0 0.0
        %264 = vmatpush1.msra.mxu0 0.0
        %265 = vmatprep.subr.mxu0 0.0
        %266 = vmatpush1.msra.mxu0 0.0
        %267 = vmatprep.subr.mxu0 0.0
        %268 = vmatpush1.msra.mxu0 0.0
        %269 = vmatprep.subr.mxu0 0.0
        %270 = vmatpush1.msra.mxu0 0.0
        %271 = vmatprep.subr.mxu0 0.0
        %272 = vmatpush1.msra.mxu0 0.0
        %273 = vmatprep.mubr.f32.mxu0 0.0
        %274 = vmatmul.mubr.f32.gmra.mrb[0].mxu0 %v192
        %v275 = vpop.f32.mrb[0].mxu0
        %v276 = vadd.f32 0.0, %v275
        %v277 = vpop.f32.mrb[0].mxu0
        %278 = vmatprep.mubr.f32.mxu0 0.0
        %279 = vmatmul.mubr.f32.gmra.mrb[0].mxu0 %v195
        %v280 = vpop.f32.mrb[0].mxu0
        %v281 = vadd.f32 0.0, %v280
        %v282 = vpop.f32.mrb[0].mxu0
        %283 = vmatprep.mubr.f32.mxu0 0.0
        %284 = vmatmul.mubr.f32.gmra.mrb[0].mxu0 %v198
        %v285 = vpop.f32.mrb[0].mxu0
        %v286 = vadd.f32 0.0, %v285
        %v287 = vpop.f32.mrb[0].mxu0
        %288 = vmatprep.mubr.f32.mxu0 0.0
        %289 = vmatmul.mubr.f32.gmra.mrb[0].mxu0 %v201
        %v290 = vpop.f32.mrb[0].mxu0
        %v291 = vadd.f32 0.0, %v290
        %v292 = vpop.f32.mrb[0].mxu0
        %293 = vmatprep.mubr.f32.mxu0 0.0
        %294 = vmatmul.mubr.f32.gmra.mrb[0].mxu0 %v204
        %v295 = vpop.f32.mrb[0].mxu0
        %v296 = vadd.f32 0.0, %v295
        %v297 = vpop.f32.mrb[0].mxu0
        %298 = vmatprep.mubr.f32.mxu0 0.0
        %299 = vmatmul.mubr.f32.gmra.mrb[0].mxu0 %v207
        %v300 = vpop.f32.mrb[0].mxu0
        %v301 = vadd.f32 0.0, %v300
        %v302 = vpop.f32.mrb[0].mxu0
        %303 = vdwg.mxu0
        %v305 = vsel %vm190, %v169, 0
        %v308 = vsel %vm190, %v170, 0
        %v311 = vsel %vm190, %v171, 0
        %v314 = vsel %vm190, %v172, 0
        %v317 = vsel %vm190, %v173, 0
        %v320 = vsel %vm190, %v174, 0
        %322 = vmatprep.subr.mxu0 0.0
        %323 = vmatpush1.msra.mxu0 %v175
        %324 = vmatprep.subr.mxu0 0.0
        %325 = vmatpush1.msra.mxu0 %v176
        %326 = vmatprep.subr.mxu0 0.0
        %327 = vmatpush1.msra.mxu0 %v177
        %328 = vmatprep.subr.mxu0 0.0
        %329 = vmatpush1.msra.mxu0 %v178
        %330 = vmatprep.subr.mxu0 0.0
        %331 = vmatpush1.msra.mxu0 0.0
        %332 = vmatprep.subr.mxu0 0.0
        %333 = vmatpush1.msra.mxu0 0.0
        %334 = vmatprep.subr.mxu0 0.0
        %335 = vmatpush1.msra.mxu0 0.0
        %336 = vmatprep.subr.mxu0 0.0
        %337 = vmatpush1.msra.mxu0 0.0
        %338 = vmatprep.subr.mxu0 0.0
        %339 = vmatpush1.msra.mxu0 0.0
        %340 = vmatprep.subr.mxu0 0.0
        %341 = vmatpush1.msra.mxu0 0.0
        %342 = vmatprep.subr.mxu0 0.0
        %343 = vmatpush1.msra.mxu0 0.0
        %344 = vmatprep.subr.mxu0 0.0
        %345 = vmatpush1.msra.mxu0 0.0
        %346 = vmatprep.subr.mxu0 0.0
        %347 = vmatpush1.msra.mxu0 0.0
        %348 = vmatprep.subr.mxu0 0.0
        %349 = vmatpush1.msra.mxu0 0.0
        %350 = vmatprep.subr.mxu0 0.0
        %351 = vmatpush1.msra.mxu0 0.0
        %352 = vmatprep.subr.mxu0 0.0
        %353 = vmatpush1.msra.mxu0 0.0
        %354 = vmatprep.subr.mxu0 0.0
        %355 = vmatpush1.msra.mxu0 0.0
        %356 = vmatprep.subr.mxu0 0.0
        %357 = vmatpush1.msra.mxu0 0.0
        %358 = vmatprep.subr.mxu0 0.0
        %359 = vmatpush1.msra.mxu0 0.0
        %360 = vmatprep.subr.mxu0 0.0
        %361 = vmatpush1.msra.mxu0 0.0
        %362 = vmatprep.subr.mxu0 0.0
        %363 = vmatpush1.msra.mxu0 0.0
        %364 = vmatprep.subr.mxu0 0.0
        %365 = vmatpush1.msra.mxu0 0.0
        %366 = vmatprep.subr.mxu0 0.0
        %367 = vmatpush1.msra.mxu0 0.0
        %368 = vmatprep.subr.mxu0 0.0
        %369 = vmatpush1.msra.mxu0 0.0
        %370 = vmatprep.subr.mxu0 0.0
        %371 = vmatpush1.msra.mxu0 0.0
        %372 = vmatprep.subr.mxu0 0.0
        %373 = vmatpush1.msra.mxu0 0.0
        %374 = vmatprep.subr.mxu0 0.0
        %375 = vmatpush1.msra.mxu0 0.0
        %376 = vmatprep.subr.mxu0 0.0
        %377 = vmatpush1.msra.mxu0 0.0
        %378 = vmatprep.subr.mxu0 0.0
        %379 = vmatpush1.msra.mxu0 0.0
        %380 = vmatprep.subr.mxu0 0.0
        %381 = vmatpush1.msra.mxu0 0.0
        %382 = vmatprep.subr.mxu0 0.0
        %383 = vmatpush1.msra.mxu0 0.0
        %384 = vmatprep.subr.mxu0 0.0
        %385 = vmatpush1.msra.mxu0 0.0
        %386 = vmatprep.mubr.f32.mxu0 0.0
        %387 = vmatmul.mubr.f32.gmra.mrb[0].mxu0 %v305
        %v388 = vpop.f32.mrb[0].mxu0
        %v389 = vadd.f32 %v276, %v388
        %v390 = vpop.f32.mrb[0].mxu0
        %391 = vmatprep.mubr.f32.mxu0 0.0
        %392 = vmatmul.mubr.f32.gmra.mrb[0].mxu0 %v308
        %v393 = vpop.f32.mrb[0].mxu0
        %v394 = vadd.f32 %v281, %v393
        %v395 = vpop.f32.mrb[0].mxu0
        %396 = vmatprep.mubr.f32.mxu0 0.0
        %397 = vmatmul.mubr.f32.gmra.mrb[0].mxu0 %v311
        %v398 = vpop.f32.mrb[0].mxu0
        %v399 = vadd.f32 %v286, %v398
        %v400 = vpop.f32.mrb[0].mxu0
        %401 = vmatprep.mubr.f32.mxu0 0.0
        %402 = vmatmul.mubr.f32.gmra.mrb[0].mxu0 %v314
        %v403 = vpop.f32.mrb[0].mxu0
        %v404 = vadd.f32 %v291, %v403
        %v405 = vpop.f32.mrb[0].mxu0
        %406 = vmatprep.mubr.f32.mxu0 0.0
        %407 = vmatmul.mubr.f32.gmra.mrb[0].mxu0 %v317
        %v408 = vpop.f32.mrb[0].mxu0
        %v409 = vadd.f32 %v296, %v408
        %v410 = vpop.f32.mrb[0].mxu0
        %411 = vmatprep.mubr.f32.mxu0 0.0
        %412 = vmatmul.mubr.f32.gmra.mrb[0].mxu0 %v320
        %v413 = vpop.f32.mrb[0].mxu0
        %v414 = vadd.f32 %v301, %v413
        %v415 = vpop.f32.mrb[0].mxu0
        %416 = vdwg.mxu0
        %v417 = vld [vmem:[%s168 + $0x2] sm:$0xff]
        %v418 = vld [vmem:[%s168 + $0x12] sm:$0xff]
        %v419 = vld [vmem:[%s168 + $0x22] sm:$0xff]
        %v420 = vld [vmem:[%s168 + $0x32] sm:$0xff]
        %v421 = vld [vmem:[%s168 + $0x42] sm:$0xff]
        %v422 = vld [vmem:[%s168 + $0x52] sm:$0xff]
        %s423 = scalar_lea.vmem %s1, 64
        %v424 = vld [vmem:[%s423] sm:$0xff]
        %v425 = vld [vmem:[%s423 + $0x8] sm:$0xff]
        %v426 = vld [vmem:[%s423 + $0x10] sm:$0xff]
        %v427 = vld [vmem:[%s423 + $0x18] sm:$0xff]
        %v429 = vsel %vm190, %v417, 0
        %v432 = vsel %vm190, %v418, 0
        %v435 = vsel %vm190, %v419, 0
        %v438 = vsel %vm190, %v420, 0
        %v441 = vsel %vm190, %v421, 0
        %v444 = vsel %vm190, %v422, 0
        %446 = vmatprep.subr.mxu0 0.0
        %447 = vmatpush1.msra.mxu0 %v424
        %448 = vmatprep.subr.mxu0 0.0
        %449 = vmatpush1.msra.mxu0 %v425
        %450 = vmatprep.subr.mxu0 0.0
        %451 = vmatpush1.msra.mxu0 %v426
        %452 = vmatprep.subr.mxu0 0.0
        %453 = vmatpush1.msra.mxu0 %v427
        %454 = vmatprep.subr.mxu0 0.0
        %455 = vmatpush1.msra.mxu0 0.0
        %456 = vmatprep.subr.mxu0 0.0
        %457 = vmatpush1.msra.mxu0 0.0
        %458 = vmatprep.subr.mxu0 0.0
        %459 = vmatpush1.msra.mxu0 0.0
        %460 = vmatprep.subr.mxu0 0.0
        %461 = vmatpush1.msra.mxu0 0.0
        %462 = vmatprep.subr.mxu0 0.0
        %463 = vmatpush1.msra.mxu0 0.0
        %464 = vmatprep.subr.mxu0 0.0
        %465 = vmatpush1.msra.mxu0 0.0
        %466 = vmatprep.subr.mxu0 0.0
        %467 = vmatpush1.msra.mxu0 0.0
        %468 = vmatprep.subr.mxu0 0.0
        %469 = vmatpush1.msra.mxu0 0.0
        %470 = vmatprep.subr.mxu0 0.0
        %471 = vmatpush1.msra.mxu0 0.0
        %472 = vmatprep.subr.mxu0 0.0
        %473 = vmatpush1.msra.mxu0 0.0
        %474 = vmatprep.subr.mxu0 0.0
        %475 = vmatpush1.msra.mxu0 0.0
        %476 = vmatprep.subr.mxu0 0.0
        %477 = vmatpush1.msra.mxu0 0.0
        %478 = vmatprep.subr.mxu0 0.0
        %479 = vmatpush1.msra.mxu0 0.0
        %480 = vmatprep.subr.mxu0 0.0
        %481 = vmatpush1.msra.mxu0 0.0
        %482 = vmatprep.subr.mxu0 0.0
        %483 = vmatpush1.msra.mxu0 0.0
        %484 = vmatprep.subr.mxu0 0.0
        %485 = vmatpush1.msra.mxu0 0.0
        %486 = vmatprep.subr.mxu0 0.0
        %487 = vmatpush1.msra.mxu0 0.0
        %488 = vmatprep.subr.mxu0 0.0
        %489 = vmatpush1.msra.mxu0 0.0
        %490 = vmatprep.subr.mxu0 0.0
        %491 = vmatpush1.msra.mxu0 0.0
        %492 = vmatprep.subr.mxu0 0.0
        %493 = vmatpush1.msra.mxu0 0.0
        %494 = vmatprep.subr.mxu0 0.0
        %495 = vmatpush1.msra.mxu0 0.0
        %496 = vmatprep.subr.mxu0 0.0
        %497 = vmatpush1.msra.mxu0 0.0
        %498 = vmatprep.subr.mxu0 0.0
        %499 = vmatpush1.msra.mxu0 0.0
        %500 = vmatprep.subr.mxu0 0.0
        %501 = vmatpush1.msra.mxu0 0.0
        %502 = vmatprep.subr.mxu0 0.0
        %503 = vmatpush1.msra.mxu0 0.0
        %504 = vmatprep.subr.mxu0 0.0
        %505 = vmatpush1.msra.mxu0 0.0
        %506 = vmatprep.subr.mxu0 0.0
        %507 = vmatpush1.msra.mxu0 0.0
        %508 = vmatprep.subr.mxu0 0.0
        %509 = vmatpush1.msra.mxu0 0.0
        %510 = vmatprep.mubr.f32.mxu0 0.0
        %511 = vmatmul.mubr.f32.gmra.mrb[0].mxu0 %v429
        %v512 = vpop.f32.mrb[0].mxu0
        %v513 = vadd.f32 0.0, %v512
        %v514 = vpop.f32.mrb[0].mxu0
        %515 = vmatprep.mubr.f32.mxu0 0.0
        %516 = vmatmul.mubr.f32.gmra.mrb[0].mxu0 %v432
        %v517 = vpop.f32.mrb[0].mxu0
        %v518 = vadd.f32 0.0, %v517
        %v519 = vpop.f32.mrb[0].mxu0
        %520 = vmatprep.mubr.f32.mxu0 0.0
        %521 = vmatmul.mubr.f32.gmra.mrb[0].mxu0 %v435
        %v522 = vpop.f32.mrb[0].mxu0
        %v523 = vadd.f32 0.0, %v522
        %v524 = vpop.f32.mrb[0].mxu0
        %525 = vmatprep.mubr.f32.mxu0 0.0
        %526 = vmatmul.mubr.f32.gmra.mrb[0].mxu0 %v438
        %v527 = vpop.f32.mrb[0].mxu0
        %v528 = vadd.f32 0.0, %v527
        %v529 = vpop.f32.mrb[0].mxu0
        %530 = vmatprep.mubr.f32.mxu0 0.0
        %531 = vmatmul.mubr.f32.gmra.mrb[0].mxu0 %v441
        %v532 = vpop.f32.mrb[0].mxu0
        %v533 = vadd.f32 0.0, %v532
        %v534 = vpop.f32.mrb[0].mxu0
        %535 = vmatprep.mubr.f32.mxu0 0.0
        %536 = vmatmul.mubr.f32.gmra.mrb[0].mxu0 %v444
        %v537 = vpop.f32.mrb[0].mxu0
        %v538 = vadd.f32 0.0, %v537
        %v539 = vpop.f32.mrb[0].mxu0
        %540 = vdwg.mxu0
        %v541 = vadd.f32 %v389, %v513
        %v542 = vadd.f32 %v394, %v518
        %v543 = vadd.f32 %v399, %v523
        %v544 = vadd.f32 %v404, %v528
        %v545 = vadd.f32 %v409, %v533
        %v546 = vadd.f32 %v414, %v538
        %s547 = scalar_lea.vmem %s168, 16
        %v548 = vld [vmem:[%s547] sm:$0xff]
        %v549 = vld [vmem:[%s547 + $0x10] sm:$0xff]
        %v550 = vld [vmem:[%s547 + $0x20] sm:$0xff]
        %v551 = vld [vmem:[%s547 + $0x30] sm:$0xff]
        %v552 = vld [vmem:[%s547 + $0x40] sm:$0xff]
        %v553 = vld [vmem:[%s547 + $0x50] sm:$0xff]
        %s554 = scalar_lea.vmem %s1, 96
        %v555 = vld [vmem:[%s554] sm:$0xff]
        %v556 = vld [vmem:[%s554 + $0x8] sm:$0xff]
        %v557 = vld [vmem:[%s554 + $0x10] sm:$0xff]
        %v558 = vld [vmem:[%s554 + $0x18] sm:$0xff]
        %v560 = vsel %vm190, %v548, 0
        %v563 = vsel %vm190, %v549, 0
        %v566 = vsel %vm190, %v550, 0
        %v569 = vsel %vm190, %v551, 0
        %v572 = vsel %vm190, %v552, 0
        %v575 = vsel %vm190, %v553, 0
        %577 = vmatprep.subr.mxu0 0.0
        %578 = vmatpush1.msra.mxu0 %v555
        %579 = vmatprep.subr.mxu0 0.0
        %580 = vmatpush1.msra.mxu0 %v556
        %581 = vmatprep.subr.mxu0 0.0
        %582 = vmatpush1.msra.mxu0 %v557
        %583 = vmatprep.subr.mxu0 0.0
        %584 = vmatpush1.msra.mxu0 %v558
        %585 = vmatprep.subr.mxu0 0.0
        %586 = vmatpush1.msra.mxu0 0.0
        %587 = vmatprep.subr.mxu0 0.0
        %588 = vmatpush1.msra.mxu0 0.0
        %589 = vmatprep.subr.mxu0 0.0
        %590 = vmatpush1.msra.mxu0 0.0
        %591 = vmatprep.subr.mxu0 0.0
        %592 = vmatpush1.msra.mxu0 0.0
        %593 = vmatprep.subr.mxu0 0.0
        %594 = vmatpush1.msra.mxu0 0.0
        %595 = vmatprep.subr.mxu0 0.0
        %596 = vmatpush1.msra.mxu0 0.0
        %597 = vmatprep.subr.mxu0 0.0
        %598 = vmatpush1.msra.mxu0 0.0
        %599 = vmatprep.subr.mxu0 0.0
        %600 = vmatpush1.msra.mxu0 0.0
        %601 = vmatprep.subr.mxu0 0.0
        %602 = vmatpush1.msra.mxu0 0.0
        %603 = vmatprep.subr.mxu0 0.0
        %604 = vmatpush1.msra.mxu0 0.0
        %605 = vmatprep.subr.mxu0 0.0
        %606 = vmatpush1.msra.mxu0 0.0
        %607 = vmatprep.subr.mxu0 0.0
        %608 = vmatpush1.msra.mxu0 0.0
        %609 = vmatprep.subr.mxu0 0.0
        %610 = vmatpush1.msra.mxu0 0.0
        %611 = vmatprep.subr.mxu0 0.0
        %612 = vmatpush1.msra.mxu0 0.0
        %613 = vmatprep.subr.mxu0 0.0
        %614 = vmatpush1.msra.mxu0 0.0
        %615 = vmatprep.subr.mxu0 0.0
        %616 = vmatpush1.msra.mxu0 0.0
        %617 = vmatprep.subr.mxu0 0.0
        %618 = vmatpush1.msra.mxu0 0.0
        %619 = vmatprep.subr.mxu0 0.0
        %620 = vmatpush1.msra.mxu0 0.0
        %621 = vmatprep.subr.mxu0 0.0
        %622 = vmatpush1.msra.mxu0 0.0
        %623 = vmatprep.subr.mxu0 0.0
        %624 = vmatpush1.msra.mxu0 0.0
        %625 = vmatprep.subr.mxu0 0.0
        %626 = vmatpush1.msra.mxu0 0.0
        %627 = vmatprep.subr.mxu0 0.0
        %628 = vmatpush1.msra.mxu0 0.0
        %629 = vmatprep.subr.mxu0 0.0
        %630 = vmatpush1.msra.mxu0 0.0
        %631 = vmatprep.subr.mxu0 0.0
        %632 = vmatpush1.msra.mxu0 0.0
        %633 = vmatprep.subr.mxu0 0.0
        %634 = vmatpush1.msra.mxu0 0.0
        %635 = vmatprep.subr.mxu0 0.0
        %636 = vmatpush1.msra.mxu0 0.0
        %637 = vmatprep.subr.mxu0 0.0
        %638 = vmatpush1.msra.mxu0 0.0
        %639 = vmatprep.subr.mxu0 0.0
        %640 = vmatpush1.msra.mxu0 0.0
        %641 = vmatprep.mubr.f32.mxu0 0.0
        %642 = vmatmul.mubr.f32.gmra.mrb[0].mxu0 %v560
        %v643 = vpop.f32.mrb[0].mxu0
        %v644 = vadd.f32 0.0, %v643
        %v645 = vpop.f32.mrb[0].mxu0
        %646 = vmatprep.mubr.f32.mxu0 0.0
        %647 = vmatmul.mubr.f32.gmra.mrb[0].mxu0 %v563
        %v648 = vpop.f32.mrb[0].mxu0
        %v649 = vadd.f32 0.0, %v648
        %v650 = vpop.f32.mrb[0].mxu0
        %651 = vmatprep.mubr.f32.mxu0 0.0
        %652 = vmatmul.mubr.f32.gmra.mrb[0].mxu0 %v566
        %v653 = vpop.f32.mrb[0].mxu0
        %v654 = vadd.f32 0.0, %v653
        %v655 = vpop.f32.mrb[0].mxu0
        %656 = vmatprep.mubr.f32.mxu0 0.0
        %657 = vmatmul.mubr.f32.gmra.mrb[0].mxu0 %v569
        %v658 = vpop.f32.mrb[0].mxu0
        %v659 = vadd.f32 0.0, %v658
        %v660 = vpop.f32.mrb[0].mxu0
        %661 = vmatprep.mubr.f32.mxu0 0.0
        %662 = vmatmul.mubr.f32.gmra.mrb[0].mxu0 %v572
        %v663 = vpop.f32.mrb[0].mxu0
        %v664 = vadd.f32 0.0, %v663
        %v665 = vpop.f32.mrb[0].mxu0
        %666 = vmatprep.mubr.f32.mxu0 0.0
        %667 = vmatmul.mubr.f32.gmra.mrb[0].mxu0 %v575
        %v668 = vpop.f32.mrb[0].mxu0
        %v669 = vadd.f32 0.0, %v668
        %v670 = vpop.f32.mrb[0].mxu0
        %671 = vdwg.mxu0
        %v672 = vadd.f32 %v541, %v644
        %v673 = vadd.f32 %v542, %v649
        %v674 = vadd.f32 %v543, %v654
        %v675 = vadd.f32 %v544, %v659
        %v676 = vadd.f32 %v545, %v664
        %v677 = vadd.f32 %v546, %v669
        %v678 = vld [vmem:[%s547 + $0x1] sm:$0xff]
        %v679 = vld [vmem:[%s547 + $0x11] sm:$0xff]
        %v680 = vld [vmem:[%s547 + $0x21] sm:$0xff]
        %v681 = vld [vmem:[%s547 + $0x31] sm:$0xff]
        %v682 = vld [vmem:[%s547 + $0x41] sm:$0xff]
        %v683 = vld [vmem:[%s547 + $0x51] sm:$0xff]
        %s684 = scalar_lea.vmem %s1, 128
        %v685 = vld [vmem:[%s684] sm:$0xff]
        %v686 = vld [vmem:[%s684 + $0x8] sm:$0xff]
        %v687 = vld [vmem:[%s684 + $0x10] sm:$0xff]
        %v688 = vld [vmem:[%s684 + $0x18] sm:$0xff]
        %v690 = vsel %vm190, %v678, 0
        %v693 = vsel %vm190, %v679, 0
        %v696 = vsel %vm190, %v680, 0
        %v699 = vsel %vm190, %v681, 0
        %v702 = vsel %vm190, %v682, 0
        %v705 = vsel %vm190, %v683, 0
        %707 = vmatprep.subr.mxu0 0.0
        %708 = vmatpush1.msra.mxu0 %v685
        %709 = vmatprep.subr.mxu0 0.0
        %710 = vmatpush1.msra.mxu0 %v686
        %711 = vmatprep.subr.mxu0 0.0
        %712 = vmatpush1.msra.mxu0 %v687
        %713 = vmatprep.subr.mxu0 0.0
        %714 = vmatpush1.msra.mxu0 %v688
        %715 = vmatprep.subr.mxu0 0.0
        %716 = vmatpush1.msra.mxu0 0.0
        %717 = vmatprep.subr.mxu0 0.0
        %718 = vmatpush1.msra.mxu0 0.0
        %719 = vmatprep.subr.mxu0 0.0
        %720 = vmatpush1.msra.mxu0 0.0
        %721 = vmatprep.subr.mxu0 0.0
        %722 = vmatpush1.msra.mxu0 0.0
        %723 = vmatprep.subr.mxu0 0.0
        %724 = vmatpush1.msra.mxu0 0.0
        %725 = vmatprep.subr.mxu0 0.0
        %726 = vmatpush1.msra.mxu0 0.0
        %727 = vmatprep.subr.mxu0 0.0
        %728 = vmatpush1.msra.mxu0 0.0
        %729 = vmatprep.subr.mxu0 0.0
        %730 = vmatpush1.msra.mxu0 0.0
        %731 = vmatprep.subr.mxu0 0.0
        %732 = vmatpush1.msra.mxu0 0.0
        %733 = vmatprep.subr.mxu0 0.0
        %734 = vmatpush1.msra.mxu0 0.0
        %735 = vmatprep.subr.mxu0 0.0
        %736 = vmatpush1.msra.mxu0 0.0
        %737 = vmatprep.subr.mxu0 0.0
        %738 = vmatpush1.msra.mxu0 0.0
        %739 = vmatprep.subr.mxu0 0.0
        %740 = vmatpush1.msra.mxu0 0.0
        %741 = vmatprep.subr.mxu0 0.0
        %742 = vmatpush1.msra.mxu0 0.0
        %743 = vmatprep.subr.mxu0 0.0
        %744 = vmatpush1.msra.mxu0 0.0
        %745 = vmatprep.subr.mxu0 0.0
        %746 = vmatpush1.msra.mxu0 0.0
        %747 = vmatprep.subr.mxu0 0.0
        %748 = vmatpush1.msra.mxu0 0.0
        %749 = vmatprep.subr.mxu0 0.0
        %750 = vmatpush1.msra.mxu0 0.0
        %751 = vmatprep.subr.mxu0 0.0
        %752 = vmatpush1.msra.mxu0 0.0
        %753 = vmatprep.subr.mxu0 0.0
        %754 = vmatpush1.msra.mxu0 0.0
        %755 = vmatprep.subr.mxu0 0.0
        %756 = vmatpush1.msra.mxu0 0.0
        %757 = vmatprep.subr.mxu0 0.0
        %758 = vmatpush1.msra.mxu0 0.0
        %759 = vmatprep.subr.mxu0 0.0
        %760 = vmatpush1.msra.mxu0 0.0
        %761 = vmatprep.subr.mxu0 0.0
        %762 = vmatpush1.msra.mxu0 0.0
        %763 = vmatprep.subr.mxu0 0.0
        %764 = vmatpush1.msra.mxu0 0.0
        %765 = vmatprep.subr.mxu0 0.0
        %766 = vmatpush1.msra.mxu0 0.0
        %767 = vmatprep.subr.mxu0 0.0
        %768 = vmatpush1.msra.mxu0 0.0
        %769 = vmatprep.subr.mxu0 0.0
        %770 = vmatpush1.msra.mxu0 0.0
        %771 = vmatprep.mubr.f32.mxu0 0.0
        %772 = vmatmul.mubr.f32.gmra.mrb[0].mxu0 %v690
        %v773 = vpop.f32.mrb[0].mxu0
        %v774 = vadd.f32 0.0, %v773
        %v775 = vpop.f32.mrb[0].mxu0
        %776 = vmatprep.mubr.f32.mxu0 0.0
        %777 = vmatmul.mubr.f32.gmra.mrb[0].mxu0 %v693
        %v778 = vpop.f32.mrb[0].mxu0
        %v779 = vadd.f32 0.0, %v778
        %v780 = vpop.f32.mrb[0].mxu0
        %781 = vmatprep.mubr.f32.mxu0 0.0
        %782 = vmatmul.mubr.f32.gmra.mrb[0].mxu0 %v696
        %v783 = vpop.f32.mrb[0].mxu0
        %v784 = vadd.f32 0.0, %v783
        %v785 = vpop.f32.mrb[0].mxu0
        %786 = vmatprep.mubr.f32.mxu0 0.0
        %787 = vmatmul.mubr.f32.gmra.mrb[0].mxu0 %v699
        %v788 = vpop.f32.mrb[0].mxu0
        %v789 = vadd.f32 0.0, %v788
        %v790 = vpop.f32.mrb[0].mxu0
        %791 = vmatprep.mubr.f32.mxu0 0.0
        %792 = vmatmul.mubr.f32.gmra.mrb[0].mxu0 %v702
        %v793 = vpop.f32.mrb[0].mxu0
        %v794 = vadd.f32 0.0, %v793
        %v795 = vpop.f32.mrb[0].mxu0
        %796 = vmatprep.mubr.f32.mxu0 0.0
        %797 = vmatmul.mubr.f32.gmra.mrb[0].mxu0 %v705
        %v798 = vpop.f32.mrb[0].mxu0
        %v799 = vadd.f32 0.0, %v798
        %v800 = vpop.f32.mrb[0].mxu0
        %801 = vdwg.mxu0
        %v802 = vadd.f32 %v672, %v774
        %v803 = vadd.f32 %v673, %v779
        %v804 = vadd.f32 %v674, %v784
        %v805 = vadd.f32 %v675, %v789
        %v806 = vadd.f32 %v676, %v794
        %v807 = vadd.f32 %v677, %v799
        %v808 = vld [vmem:[%s547 + $0x2] sm:$0xff]
        %v809 = vld [vmem:[%s547 + $0x12] sm:$0xff]
        %v810 = vld [vmem:[%s547 + $0x22] sm:$0xff]
        %v811 = vld [vmem:[%s547 + $0x32] sm:$0xff]
        %v812 = vld [vmem:[%s547 + $0x42] sm:$0xff]
        %v813 = vld [vmem:[%s547 + $0x52] sm:$0xff]
        %s814 = scalar_lea.vmem %s1, 160
        %v815 = vld [vmem:[%s814] sm:$0xff]
        %v816 = vld [vmem:[%s814 + $0x8] sm:$0xff]
        %v817 = vld [vmem:[%s814 + $0x10] sm:$0xff]
        %v818 = vld [vmem:[%s814 + $0x18] sm:$0xff]
        %v820 = vsel %vm190, %v808, 0
        %v823 = vsel %vm190, %v809, 0
        %v826 = vsel %vm190, %v810, 0
        %v829 = vsel %vm190, %v811, 0
        %v832 = vsel %vm190, %v812, 0
        %v835 = vsel %vm190, %v813, 0
        %837 = vmatprep.subr.mxu0 0.0
        %838 = vmatpush1.msra.mxu0 %v815
        %839 = vmatprep.subr.mxu0 0.0
        %840 = vmatpush1.msra.mxu0 %v816
        %841 = vmatprep.subr.mxu0 0.0
        %842 = vmatpush1.msra.mxu0 %v817
        %843 = vmatprep.subr.mxu0 0.0
        %844 = vmatpush1.msra.mxu0 %v818
        %845 = vmatprep.subr.mxu0 0.0
        %846 = vmatpush1.msra.mxu0 0.0
        %847 = vmatprep.subr.mxu0 0.0
        %848 = vmatpush1.msra.mxu0 0.0
        %849 = vmatprep.subr.mxu0 0.0
        %850 = vmatpush1.msra.mxu0 0.0
        %851 = vmatprep.subr.mxu0 0.0
        %852 = vmatpush1.msra.mxu0 0.0
        %853 = vmatprep.subr.mxu0 0.0
        %854 = vmatpush1.msra.mxu0 0.0
        %855 = vmatprep.subr.mxu0 0.0
        %856 = vmatpush1.msra.mxu0 0.0
        %857 = vmatprep.subr.mxu0 0.0
        %858 = vmatpush1.msra.mxu0 0.0
        %859 = vmatprep.subr.mxu0 0.0
        %860 = vmatpush1.msra.mxu0 0.0
        %861 = vmatprep.subr.mxu0 0.0
        %862 = vmatpush1.msra.mxu0 0.0
        %863 = vmatprep.subr.mxu0 0.0
        %864 = vmatpush1.msra.mxu0 0.0
        %865 = vmatprep.subr.mxu0 0.0
        %866 = vmatpush1.msra.mxu0 0.0
        %867 = vmatprep.subr.mxu0 0.0
        %868 = vmatpush1.msra.mxu0 0.0
        %869 = vmatprep.subr.mxu0 0.0
        %870 = vmatpush1.msra.mxu0 0.0
        %871 = vmatprep.subr.mxu0 0.0
        %872 = vmatpush1.msra.mxu0 0.0
        %873 = vmatprep.subr.mxu0 0.0
        %874 = vmatpush1.msra.mxu0 0.0
        %875 = vmatprep.subr.mxu0 0.0
        %876 = vmatpush1.msra.mxu0 0.0
        %877 = vmatprep.subr.mxu0 0.0
        %878 = vmatpush1.msra.mxu0 0.0
        %879 = vmatprep.subr.mxu0 0.0
        %880 = vmatpush1.msra.mxu0 0.0
        %881 = vmatprep.subr.mxu0 0.0
        %882 = vmatpush1.msra.mxu0 0.0
        %883 = vmatprep.subr.mxu0 0.0
        %884 = vmatpush1.msra.mxu0 0.0
        %885 = vmatprep.subr.mxu0 0.0
        %886 = vmatpush1.msra.mxu0 0.0
        %887 = vmatprep.subr.mxu0 0.0
        %888 = vmatpush1.msra.mxu0 0.0
        %889 = vmatprep.subr.mxu0 0.0
        %890 = vmatpush1.msra.mxu0 0.0
        %891 = vmatprep.subr.mxu0 0.0
        %892 = vmatpush1.msra.mxu0 0.0
        %893 = vmatprep.subr.mxu0 0.0
        %894 = vmatpush1.msra.mxu0 0.0
        %895 = vmatprep.subr.mxu0 0.0
        %896 = vmatpush1.msra.mxu0 0.0
        %897 = vmatprep.subr.mxu0 0.0
        %898 = vmatpush1.msra.mxu0 0.0
        %899 = vmatprep.subr.mxu0 0.0
        %900 = vmatpush1.msra.mxu0 0.0
        %901 = vmatprep.mubr.f32.mxu0 0.0
        %902 = vmatmul.mubr.f32.gmra.mrb[0].mxu0 %v820
        %v903 = vpop.f32.mrb[0].mxu0
        %v904 = vadd.f32 0.0, %v903
        %v905 = vpop.f32.mrb[0].mxu0
        %906 = vmatprep.mubr.f32.mxu0 0.0
        %907 = vmatmul.mubr.f32.gmra.mrb[0].mxu0 %v823
        %v908 = vpop.f32.mrb[0].mxu0
        %v909 = vadd.f32 0.0, %v908
        %v910 = vpop.f32.mrb[0].mxu0
        %911 = vmatprep.mubr.f32.mxu0 0.0
        %912 = vmatmul.mubr.f32.gmra.mrb[0].mxu0 %v826
        %v913 = vpop.f32.mrb[0].mxu0
        %v914 = vadd.f32 0.0, %v913
        %v915 = vpop.f32.mrb[0].mxu0
        %916 = vmatprep.mubr.f32.mxu0 0.0
        %917 = vmatmul.mubr.f32.gmra.mrb[0].mxu0 %v829
        %v918 = vpop.f32.mrb[0].mxu0
        %v919 = vadd.f32 0.0, %v918
        %v920 = vpop.f32.mrb[0].mxu0
        %921 = vmatprep.mubr.f32.mxu0 0.0
        %922 = vmatmul.mubr.f32.gmra.mrb[0].mxu0 %v832
        %v923 = vpop.f32.mrb[0].mxu0
        %v924 = vadd.f32 0.0, %v923
        %v925 = vpop.f32.mrb[0].mxu0
        %926 = vmatprep.mubr.f32.mxu0 0.0
        %927 = vmatmul.mubr.f32.gmra.mrb[0].mxu0 %v835
        %v928 = vpop.f32.mrb[0].mxu0
        %v929 = vadd.f32 0.0, %v928
        %v930 = vpop.f32.mrb[0].mxu0
        %931 = vdwg.mxu0
        %v932 = vadd.f32 %v802, %v904
        %v933 = vadd.f32 %v803, %v909
        %v934 = vadd.f32 %v804, %v914
        %v935 = vadd.f32 %v805, %v919
        %v936 = vadd.f32 %v806, %v924
        %v937 = vadd.f32 %v807, %v929
        %s938 = scalar_lea.vmem %s168, 32
        %v939 = vld [vmem:[%s938] sm:$0xff]
        %v940 = vld [vmem:[%s938 + $0x10] sm:$0xff]
        %v941 = vld [vmem:[%s938 + $0x20] sm:$0xff]
        %v942 = vld [vmem:[%s938 + $0x30] sm:$0xff]
        %v943 = vld [vmem:[%s938 + $0x40] sm:$0xff]
        %v944 = vld [vmem:[%s938 + $0x50] sm:$0xff]
        %s945 = scalar_lea.vmem %s1, 192
        %v946 = vld [vmem:[%s945] sm:$0xff]
        %v947 = vld [vmem:[%s945 + $0x8] sm:$0xff]
        %v948 = vld [vmem:[%s945 + $0x10] sm:$0xff]
        %v949 = vld [vmem:[%s945 + $0x18] sm:$0xff]
        %v951 = vsel %vm190, %v939, 0
        %v954 = vsel %vm190, %v940, 0
        %v957 = vsel %vm190, %v941, 0
        %v960 = vsel %vm190, %v942, 0
        %v963 = vsel %vm190, %v943, 0
        %v966 = vsel %vm190, %v944, 0
        %968 = vmatprep.subr.mxu0 0.0
        %969 = vmatpush1.msra.mxu0 %v946
        %970 = vmatprep.subr.mxu0 0.0
        %971 = vmatpush1.msra.mxu0 %v947
        %972 = vmatprep.subr.mxu0 0.0
        %973 = vmatpush1.msra.mxu0 %v948
        %974 = vmatprep.subr.mxu0 0.0
        %975 = vmatpush1.msra.mxu0 %v949
        %976 = vmatprep.subr.mxu0 0.0
        %977 = vmatpush1.msra.mxu0 0.0
        %978 = vmatprep.subr.mxu0 0.0
        %979 = vmatpush1.msra.mxu0 0.0
        %980 = vmatprep.subr.mxu0 0.0
        %981 = vmatpush1.msra.mxu0 0.0
        %982 = vmatprep.subr.mxu0 0.0
        %983 = vmatpush1.msra.mxu0 0.0
        %984 = vmatprep.subr.mxu0 0.0
        %985 = vmatpush1.msra.mxu0 0.0
        %986 = vmatprep.subr.mxu0 0.0
        %987 = vmatpush1.msra.mxu0 0.0
        %988 = vmatprep.subr.mxu0 0.0
        %989 = vmatpush1.msra.mxu0 0.0
        %990 = vmatprep.subr.mxu0 0.0
        %991 = vmatpush1.msra.mxu0 0.0
        %992 = vmatprep.subr.mxu0 0.0
        %993 = vmatpush1.msra.mxu0 0.0
        %994 = vmatprep.subr.mxu0 0.0
        %995 = vmatpush1.msra.mxu0 0.0
        %996 = vmatprep.subr.mxu0 0.0
        %997 = vmatpush1.msra.mxu0 0.0
        %998 = vmatprep.subr.mxu0 0.0
        %999 = vmatpush1.msra.mxu0 0.0
        %1000 = vmatprep.subr.mxu0 0.0
        %1001 = vmatpush1.msra.mxu0 0.0
        %1002 = vmatprep.subr.mxu0 0.0
        %1003 = vmatpush1.msra.mxu0 0.0
        %1004 = vmatprep.subr.mxu0 0.0
        %1005 = vmatpush1.msra.mxu0 0.0
        %1006 = vmatprep.subr.mxu0 0.0
        %1007 = vmatpush1.msra.mxu0 0.0
        %1008 = vmatprep.subr.mxu0 0.0
        %1009 = vmatpush1.msra.mxu0 0.0
        %1010 = vmatprep.subr.mxu0 0.0
        %1011 = vmatpush1.msra.mxu0 0.0
        %1012 = vmatprep.subr.mxu0 0.0
        %1013 = vmatpush1.msra.mxu0 0.0
        %1014 = vmatprep.subr.mxu0 0.0
        %1015 = vmatpush1.msra.mxu0 0.0
        %1016 = vmatprep.subr.mxu0 0.0
        %1017 = vmatpush1.msra.mxu0 0.0
        %1018 = vmatprep.subr.mxu0 0.0
        %1019 = vmatpush1.msra.mxu0 0.0
        %1020 = vmatprep.subr.mxu0 0.0
        %1021 = vmatpush1.msra.mxu0 0.0
        %1022 = vmatprep.subr.mxu0 0.0
        %1023 = vmatpush1.msra.mxu0 0.0
        %1024 = vmatprep.subr.mxu0 0.0
        %1025 = vmatpush1.msra.mxu0 0.0
        %1026 = vmatprep.subr.mxu0 0.0
        %1027 = vmatpush1.msra.mxu0 0.0
        %1028 = vmatprep.subr.mxu0 0.0
        %1029 = vmatpush1.msra.mxu0 0.0
        %1030 = vmatprep.subr.mxu0 0.0
        %1031 = vmatpush1.msra.mxu0 0.0
        %1032 = vmatprep.mubr.f32.mxu0 0.0
        %1033 = vmatmul.mubr.f32.gmra.mrb[0].mxu0 %v951
        %v1034 = vpop.f32.mrb[0].mxu0
        %v1035 = vadd.f32 0.0, %v1034
        %v1036 = vpop.f32.mrb[0].mxu0
        %1037 = vmatprep.mubr.f32.mxu0 0.0
        %1038 = vmatmul.mubr.f32.gmra.mrb[0].mxu0 %v954
        %v1039 = vpop.f32.mrb[0].mxu0
        %v1040 = vadd.f32 0.0, %v1039
        %v1041 = vpop.f32.mrb[0].mxu0
        %1042 = vmatprep.mubr.f32.mxu0 0.0
        %1043 = vmatmul.mubr.f32.gmra.mrb[0].mxu0 %v957
        %v1044 = vpop.f32.mrb[0].mxu0
        %v1045 = vadd.f32 0.0, %v1044
        %v1046 = vpop.f32.mrb[0].mxu0
        %1047 = vmatprep.mubr.f32.mxu0 0.0
        %1048 = vmatmul.mubr.f32.gmra.mrb[0].mxu0 %v960
        %v1049 = vpop.f32.mrb[0].mxu0
        %v1050 = vadd.f32 0.0, %v1049
        %v1051 = vpop.f32.mrb[0].mxu0
        %1052 = vmatprep.mubr.f32.mxu0 0.0
        %1053 = vmatmul.mubr.f32.gmra.mrb[0].mxu0 %v963
        %v1054 = vpop.f32.mrb[0].mxu0
        %v1055 = vadd.f32 0.0, %v1054
        %v1056 = vpop.f32.mrb[0].mxu0
        %1057 = vmatprep.mubr.f32.mxu0 0.0
        %1058 = vmatmul.mubr.f32.gmra.mrb[0].mxu0 %v966
        %v1059 = vpop.f32.mrb[0].mxu0
        %v1060 = vadd.f32 0.0, %v1059
        %v1061 = vpop.f32.mrb[0].mxu0
        %1062 = vdwg.mxu0
        %v1063 = vadd.f32 %v932, %v1035
        %v1064 = vadd.f32 %v933, %v1040
        %v1065 = vadd.f32 %v934, %v1045
        %v1066 = vadd.f32 %v935, %v1050
        %v1067 = vadd.f32 %v936, %v1055
        %v1068 = vadd.f32 %v937, %v1060
        %v1069 = vld [vmem:[%s938 + $0x1] sm:$0xff]
        %v1070 = vld [vmem:[%s938 + $0x11] sm:$0xff]
        %v1071 = vld [vmem:[%s938 + $0x21] sm:$0xff]
        %v1072 = vld [vmem:[%s938 + $0x31] sm:$0xff]
        %v1073 = vld [vmem:[%s938 + $0x41] sm:$0xff]
        %v1074 = vld [vmem:[%s938 + $0x51] sm:$0xff]
        %s1075 = scalar_lea.vmem %s1, 224
        %v1076 = vld [vmem:[%s1075] sm:$0xff]
        %v1077 = vld [vmem:[%s1075 + $0x8] sm:$0xff]
        %v1078 = vld [vmem:[%s1075 + $0x10] sm:$0xff]
        %v1079 = vld [vmem:[%s1075 + $0x18] sm:$0xff]
        %v1081 = vsel %vm190, %v1069, 0
        %v1084 = vsel %vm190, %v1070, 0
        %v1087 = vsel %vm190, %v1071, 0
        %v1090 = vsel %vm190, %v1072, 0
        %v1093 = vsel %vm190, %v1073, 0
        %v1096 = vsel %vm190, %v1074, 0
        %1098 = vmatprep.subr.mxu0 0.0
        %1099 = vmatpush1.msra.mxu0 %v1076
        %1100 = vmatprep.subr.mxu0 0.0
        %1101 = vmatpush1.msra.mxu0 %v1077
        %1102 = vmatprep.subr.mxu0 0.0
        %1103 = vmatpush1.msra.mxu0 %v1078
        %1104 = vmatprep.subr.mxu0 0.0
        %1105 = vmatpush1.msra.mxu0 %v1079
        %1106 = vmatprep.subr.mxu0 0.0
        %1107 = vmatpush1.msra.mxu0 0.0
        %1108 = vmatprep.subr.mxu0 0.0
        %1109 = vmatpush1.msra.mxu0 0.0
        %1110 = vmatprep.subr.mxu0 0.0
        %1111 = vmatpush1.msra.mxu0 0.0
        %1112 = vmatprep.subr.mxu0 0.0
        %1113 = vmatpush1.msra.mxu0 0.0
        %1114 = vmatprep.subr.mxu0 0.0
        %1115 = vmatpush1.msra.mxu0 0.0
        %1116 = vmatprep.subr.mxu0 0.0
        %1117 = vmatpush1.msra.mxu0 0.0
        %1118 = vmatprep.subr.mxu0 0.0
        %1119 = vmatpush1.msra.mxu0 0.0
        %1120 = vmatprep.subr.mxu0 0.0
        %1121 = vmatpush1.msra.mxu0 0.0
        %1122 = vmatprep.subr.mxu0 0.0
        %1123 = vmatpush1.msra.mxu0 0.0
        %1124 = vmatprep.subr.mxu0 0.0
        %1125 = vmatpush1.msra.mxu0 0.0
        %1126 = vmatprep.subr.mxu0 0.0
        %1127 = vmatpush1.msra.mxu0 0.0
        %1128 = vmatprep.subr.mxu0 0.0
        %1129 = vmatpush1.msra.mxu0 0.0
        %1130 = vmatprep.subr.mxu0 0.0
        %1131 = vmatpush1.msra.mxu0 0.0
        %1132 = vmatprep.subr.mxu0 0.0
        %1133 = vmatpush1.msra.mxu0 0.0
        %1134 = vmatprep.subr.mxu0 0.0
        %1135 = vmatpush1.msra.mxu0 0.0
        %1136 = vmatprep.subr.mxu0 0.0
        %1137 = vmatpush1.msra.mxu0 0.0
        %1138 = vmatprep.subr.mxu0 0.0
        %1139 = vmatpush1.msra.mxu0 0.0
        %1140 = vmatprep.subr.mxu0 0.0
        %1141 = vmatpush1.msra.mxu0 0.0
        %1142 = vmatprep.subr.mxu0 0.0
        %1143 = vmatpush1.msra.mxu0 0.0
        %1144 = vmatprep.subr.mxu0 0.0
        %1145 = vmatpush1.msra.mxu0 0.0
        %1146 = vmatprep.subr.mxu0 0.0
        %1147 = vmatpush1.msra.mxu0 0.0
        %1148 = vmatprep.subr.mxu0 0.0
        %1149 = vmatpush1.msra.mxu0 0.0
        %1150 = vmatprep.subr.mxu0 0.0
        %1151 = vmatpush1.msra.mxu0 0.0
        %1152 = vmatprep.subr.mxu0 0.0
        %1153 = vmatpush1.msra.mxu0 0.0
        %1154 = vmatprep.subr.mxu0 0.0
        %1155 = vmatpush1.msra.mxu0 0.0
        %1156 = vmatprep.subr.mxu0 0.0
        %1157 = vmatpush1.msra.mxu0 0.0
        %1158 = vmatprep.subr.mxu0 0.0
        %1159 = vmatpush1.msra.mxu0 0.0
        %1160 = vmatprep.subr.mxu0 0.0
        %1161 = vmatpush1.msra.mxu0 0.0
        %1162 = vmatprep.mubr.f32.mxu0 0.0
        %1163 = vmatmul.mubr.f32.gmra.mrb[0].mxu0 %v1081
        %v1164 = vpop.f32.mrb[0].mxu0
        %v1165 = vadd.f32 0.0, %v1164
        %v1166 = vpop.f32.mrb[0].mxu0
        %1167 = vmatprep.mubr.f32.mxu0 0.0
        %1168 = vmatmul.mubr.f32.gmra.mrb[0].mxu0 %v1084
        %v1169 = vpop.f32.mrb[0].mxu0
        %v1170 = vadd.f32 0.0, %v1169
        %v1171 = vpop.f32.mrb[0].mxu0
        %1172 = vmatprep.mubr.f32.mxu0 0.0
        %1173 = vmatmul.mubr.f32.gmra.mrb[0].mxu0 %v1087
        %v1174 = vpop.f32.mrb[0].mxu0
        %v1175 = vadd.f32 0.0, %v1174
        %v1176 = vpop.f32.mrb[0].mxu0
        %1177 = vmatprep.mubr.f32.mxu0 0.0
        %1178 = vmatmul.mubr.f32.gmra.mrb[0].mxu0 %v1090
        %v1179 = vpop.f32.mrb[0].mxu0
        %v1180 = vadd.f32 0.0, %v1179
        %v1181 = vpop.f32.mrb[0].mxu0
        %1182 = vmatprep.mubr.f32.mxu0 0.0
        %1183 = vmatmul.mubr.f32.gmra.mrb[0].mxu0 %v1093
        %v1184 = vpop.f32.mrb[0].mxu0
        %v1185 = vadd.f32 0.0, %v1184
        %v1186 = vpop.f32.mrb[0].mxu0
        %1187 = vmatprep.mubr.f32.mxu0 0.0
        %1188 = vmatmul.mubr.f32.gmra.mrb[0].mxu0 %v1096
        %v1189 = vpop.f32.mrb[0].mxu0
        %v1190 = vadd.f32 0.0, %v1189
        %v1191 = vpop.f32.mrb[0].mxu0
        %1192 = vdwg.mxu0
        %v1193 = vadd.f32 %v1063, %v1165
        %v1194 = vadd.f32 %v1064, %v1170
        %v1195 = vadd.f32 %v1065, %v1175
        %v1196 = vadd.f32 %v1066, %v1180
        %v1197 = vadd.f32 %v1067, %v1185
        %v1198 = vadd.f32 %v1068, %v1190
        %v1199 = vld [vmem:[%s938 + $0x2] sm:$0xff]
        %v1200 = vld [vmem:[%s938 + $0x12] sm:$0xff]
        %v1201 = vld [vmem:[%s938 + $0x22] sm:$0xff]
        %v1202 = vld [vmem:[%s938 + $0x32] sm:$0xff]
        %v1203 = vld [vmem:[%s938 + $0x42] sm:$0xff]
        %v1204 = vld [vmem:[%s938 + $0x52] sm:$0xff]
        %s1205 = scalar_lea.vmem %s1, 256
        %v1206 = vld [vmem:[%s1205] sm:$0xff]
        %v1207 = vld [vmem:[%s1205 + $0x8] sm:$0xff]
        %v1208 = vld [vmem:[%s1205 + $0x10] sm:$0xff]
        %v1209 = vld [vmem:[%s1205 + $0x18] sm:$0xff]
        %v1211 = vsel %vm190, %v1199, 0
        %v1214 = vsel %vm190, %v1200, 0
        %v1217 = vsel %vm190, %v1201, 0
        %v1220 = vsel %vm190, %v1202, 0
        %v1223 = vsel %vm190, %v1203, 0
        %v1226 = vsel %vm190, %v1204, 0
        %1228 = vmatprep.subr.mxu0 0.0
        %1229 = vmatpush1.msra.mxu0 %v1206
        %1230 = vmatprep.subr.mxu0 0.0
        %1231 = vmatpush1.msra.mxu0 %v1207
        %1232 = vmatprep.subr.mxu0 0.0
        %1233 = vmatpush1.msra.mxu0 %v1208
        %1234 = vmatprep.subr.mxu0 0.0
        %1235 = vmatpush1.msra.mxu0 %v1209
        %1236 = vmatprep.subr.mxu0 0.0
        %1237 = vmatpush1.msra.mxu0 0.0
        %1238 = vmatprep.subr.mxu0 0.0
        %1239 = vmatpush1.msra.mxu0 0.0
        %1240 = vmatprep.subr.mxu0 0.0
        %1241 = vmatpush1.msra.mxu0 0.0
        %1242 = vmatprep.subr.mxu0 0.0
        %1243 = vmatpush1.msra.mxu0 0.0
        %1244 = vmatprep.subr.mxu0 0.0
        %1245 = vmatpush1.msra.mxu0 0.0
        %1246 = vmatprep.subr.mxu0 0.0
        %1247 = vmatpush1.msra.mxu0 0.0
        %1248 = vmatprep.subr.mxu0 0.0
        %1249 = vmatpush1.msra.mxu0 0.0
        %1250 = vmatprep.subr.mxu0 0.0
        %1251 = vmatpush1.msra.mxu0 0.0
        %1252 = vmatprep.subr.mxu0 0.0
        %1253 = vmatpush1.msra.mxu0 0.0
        %1254 = vmatprep.subr.mxu0 0.0
        %1255 = vmatpush1.msra.mxu0 0.0
        %1256 = vmatprep.subr.mxu0 0.0
        %1257 = vmatpush1.msra.mxu0 0.0
        %1258 = vmatprep.subr.mxu0 0.0
        %1259 = vmatpush1.msra.mxu0 0.0
        %1260 = vmatprep.subr.mxu0 0.0
        %1261 = vmatpush1.msra.mxu0 0.0
        %1262 = vmatprep.subr.mxu0 0.0
        %1263 = vmatpush1.msra.mxu0 0.0
        %1264 = vmatprep.subr.mxu0 0.0
        %1265 = vmatpush1.msra.mxu0 0.0
        %1266 = vmatprep.subr.mxu0 0.0
        %1267 = vmatpush1.msra.mxu0 0.0
        %1268 = vmatprep.subr.mxu0 0.0
        %1269 = vmatpush1.msra.mxu0 0.0
        %1270 = vmatprep.subr.mxu0 0.0
        %1271 = vmatpush1.msra.mxu0 0.0
        %1272 = vmatprep.subr.mxu0 0.0
        %1273 = vmatpush1.msra.mxu0 0.0
        %1274 = vmatprep.subr.mxu0 0.0
        %1275 = vmatpush1.msra.mxu0 0.0
        %1276 = vmatprep.subr.mxu0 0.0
        %1277 = vmatpush1.msra.mxu0 0.0
        %1278 = vmatprep.subr.mxu0 0.0
        %1279 = vmatpush1.msra.mxu0 0.0
        %1280 = vmatprep.subr.mxu0 0.0
        %1281 = vmatpush1.msra.mxu0 0.0
        %1282 = vmatprep.subr.mxu0 0.0
        %1283 = vmatpush1.msra.mxu0 0.0
        %1284 = vmatprep.subr.mxu0 0.0
        %1285 = vmatpush1.msra.mxu0 0.0
        %1286 = vmatprep.subr.mxu0 0.0
        %1287 = vmatpush1.msra.mxu0 0.0
        %1288 = vmatprep.subr.mxu0 0.0
        %1289 = vmatpush1.msra.mxu0 0.0
        %1290 = vmatprep.subr.mxu0 0.0
        %1291 = vmatpush1.msra.mxu0 0.0
        %1292 = vmatprep.mubr.f32.mxu0 0.0
        %1293 = vmatmul.mubr.f32.gmra.mrb[0].mxu0 %v1211
        %v1294 = vpop.f32.mrb[0].mxu0
        %v1295 = vadd.f32 0.0, %v1294
        %v1296 = vpop.f32.mrb[0].mxu0
        %1297 = vmatprep.mubr.f32.mxu0 0.0
        %1298 = vmatmul.mubr.f32.gmra.mrb[0].mxu0 %v1214
        %v1299 = vpop.f32.mrb[0].mxu0
        %v1300 = vadd.f32 0.0, %v1299
        %v1301 = vpop.f32.mrb[0].mxu0
        %1302 = vmatprep.mubr.f32.mxu0 0.0
        %1303 = vmatmul.mubr.f32.gmra.mrb[0].mxu0 %v1217
        %v1304 = vpop.f32.mrb[0].mxu0
        %v1305 = vadd.f32 0.0, %v1304
        %v1306 = vpop.f32.mrb[0].mxu0
        %1307 = vmatprep.mubr.f32.mxu0 0.0
        %1308 = vmatmul.mubr.f32.gmra.mrb[0].mxu0 %v1220
        %v1309 = vpop.f32.mrb[0].mxu0
        %v1310 = vadd.f32 0.0, %v1309
        %v1311 = vpop.f32.mrb[0].mxu0
        %1312 = vmatprep.mubr.f32.mxu0 0.0
        %1313 = vmatmul.mubr.f32.gmra.mrb[0].mxu0 %v1223
        %v1314 = vpop.f32.mrb[0].mxu0
        %v1315 = vadd.f32 0.0, %v1314
        %v1316 = vpop.f32.mrb[0].mxu0
        %1317 = vmatprep.mubr.f32.mxu0 0.0
        %1318 = vmatmul.mubr.f32.gmra.mrb[0].mxu0 %v1226
        %v1319 = vpop.f32.mrb[0].mxu0
        %v1320 = vadd.f32 0.0, %v1319
        %v1321 = vpop.f32.mrb[0].mxu0
        %1322 = vdwg.mxu0
        %v1323 = vadd.f32 %v1193, %v1295
        %v1324 = vadd.f32 %v1194, %v1300
        %v1325 = vadd.f32 %v1195, %v1305
        %v1326 = vadd.f32 %v1196, %v1310
        %v1327 = vadd.f32 %v1197, %v1315
        %v1328 = vadd.f32 %v1198, %v1320
        %v1329 = vld [vmem:[%s2] sm:$0x1]
        %v1331 = vlaneseq
        %v1332 = vshrl.u32 %v1331, 7
        %v1333 = vsub.s32 0, %v1332
        %v1334 = vrot.slane %v1329, %v1333
        %v1336 = vadd.f32 %v1323, %v1334
        %v1337 = vadd.f32 %v1324, %v1334
        %v1338 = vadd.f32 %v1325, %v1334
        %v1339 = vadd.f32 %v1326, %v1334
        %v1340 = vadd.f32 %v1327, %v1334
        %v1341 = vadd.f32 %v1328, %v1334
        %v1342 = vtanh.pop %v1336
        %v1343 = vtanh.pop %v1337
        %v1344 = vtanh.pop %v1338
        %v1345 = vtanh.pop %v1339
        %v1346 = vtanh.pop %v1340
        %v1347 = vtanh.pop %v1341
        %1348 = vst [vmem:[%s163] sm:$0xff] %v1342
        %1349 = vst [vmem:[%s163 + $0x8] sm:$0xff] %v1343
        %1350 = vst [vmem:[%s163 + $0x10] sm:$0xff] %v1344
        %1351 = vst [vmem:[%s163 + $0x18] sm:$0xff] %v1345
        %1352 = vst [vmem:[%s163 + $0x20] sm:$0xff] %v1346
        %1353 = vst [vmem:[%s163 + $0x28] sm:$0xff] %v1347
        %s1354 = sand.u32 %s93, 1
        %s1355 = scalar_lea.sflag [#allocation3], %s1354
        %s1356 = sand.u32 %s93, 1
        %s1357 = smul.addr %s1356, 48
        %s1358 = scalar_lea.vmem [#allocation2], %s1357
        // Predicated region
        $region33: #{tpu_custom_call.1} parent=31 // pred_check
          %p1359 = pneg %p103
        $region34: #{tpu_custom_call.1} parent=31 // pred_check_branch
          %1361 = sbr.rel (%p1359) target = $region36
        $region35: #{tpu_custom_call.1} parent=31 // pred_region
          %s1363 = ssub.s32 768, 768
          %1364 = vsyncadd %s1355, %s1363
          %s1365 = smul.addr %s17, 6
          %s1366 = smul.addr %s1365, 128
          %s1367 = scalar_lea.hbm %s3, %s1366
          %s1368 = sshll.u32 %s1358, 4
          %s1369 = int_to_ptr.vmem [resolvable:$true] %s1368
          %1374 = dma.vmem_to_hbm [thread:$0]  %s1369, 768, %s1367, %s1355, 128, 128, 8
        $region36: #{tpu_custom_call.1} parent=31 // pred_fallthru
          _
      $region32: #{tpu_custom_call.1} parent=5 // pred_fallthru
        _
      %p1375 = scmp.le.s32.totalorder 2, %s12
      // Predicated region
      $region37: #{tpu_custom_call.1} parent=5 // pred_check
        %p1376 = pneg %p1375
      $region38: #{tpu_custom_call.1} parent=5 // pred_check_branch
        %1378 = sbr.rel (%p1376) target = $region40
      $region39: #{tpu_custom_call.1} parent=5 // pred_region
        %s1379 = ssub.s32 %s12, 2
        // Predicated region
        $region41: #{tpu_custom_call.1} parent=39 // pred_check
          %p1380 = pneg %p109
        $region42: #{tpu_custom_call.1} parent=39 // pred_check_branch
          %1382 = sbr.rel (%p1380) target = $region44
        $region43: #{tpu_custom_call.1} parent=39 // pred_region
          %s1383 = sand.u32 %s94, 1
          %s1384 = scalar_lea.sflag [#allocation3], %s1383
          %s1385 = sand.u32 %s94, 1
          %s1386 = smul.addr %s1385, 48
          %s1387 = scalar_lea.vmem [#allocation2], %s1386
          %1388 = dma.done %s1384, 768
        $region44: #{tpu_custom_call.1} parent=39 // pred_fallthru
          _
      $region40: #{tpu_custom_call.1} parent=5 // pred_fallthru
        _
    $region6: #{tpu_custom_call.1} parent=1 // loop_footer
      %s16 = sadd.s32 1, %s12
    $region7: #{tpu_custom_call.1} parent=1 // loop_footer_branch
      %11 = sbr.rel target = $region3
    $region8: #{tpu_custom_call.1} parent=1 // loop_exit
      _
    %1389 = vsyncpa [#allocation3], 1
    %s1390 = scalar_lea.sflag [#allocation3], 1
    %1391 = vsyncpa %s1390, 1

</llo_original>
